<compile_context>
chip_gen: v7x
topology: tpu7x:2x2x1
jax: 0.10.0
libtpu: 0.0.40
codegen_flags: <defaults>
</compile_context>

<pallas_src>
import functools

import jax
import jax.numpy as jnp
from jax.experimental import pallas as pl
from jax.experimental.pallas import tpu as pltpu

# ---------------- config (small, consistent with the module) ----------------
HIDDEN = 32          # config.hidden_size
NUM_HEADS = 4        # config.num_attention_heads
HEAD_DIM = HIDDEN // NUM_HEADS
SEQ = 16             # sequence length
NUM_LABELS = 5       # multiple-choice options
N_EXAMPLES = 2       # "real" batch
BATCH = N_EXAMPLES * NUM_LABELS   # flat batch seen by the model

# column layout of the packed parameter slab (rows 0:H = W^T, row H = biases)
_C_Q = 0             # Wq^T / bq
_C_KV = HIDDEN       # [Wk^T | Wv^T] / [bk | bv]
_C_O = 3 * HIDDEN    # Wo^T / bo
_C_P = 4 * HIDDEN    # Wp^T / bp   (BertPooler dense)
_C_C = 5 * HIDDEN    # Wc^T / bc   (classifier, single column)
_SLAB_COLS = 6 * HIDDEN


# ---------------------------------------------------------------------------
# Fused Pallas kernel: attn_qa (query row 0 only) -> BertPooler -> classifier.
# Single grid step, everything VMEM-resident.
# ---------------------------------------------------------------------------
def _duma_fused_kernel(x_ref, q0_ref, sep_ref, w_ref, out_ref, *, nh, dh):
    B, S, H = x_ref.shape
    scale = 1.0 / float(dh) ** 0.5

    # ---- projections (2 matmuls total) -------------------------------------
    # K|V for the whole key/value (= qa) stream in ONE (B*S,H)@(H,2H) matmul.
    x2d = x_ref[...].reshape(B * S, H)
    kv = (jnp.dot(x2d, w_ref[0:H, _C_KV:_C_KV + 2 * H],
                  preferred_element_type=jnp.float32)
          + w_ref[H:H + 1, _C_KV:_C_KV + 2 * H])                  # (B*S, 2H)
    kv = kv.reshape(B, S, 2 * H)
    k = kv[:, :, 0:H]                                             # (B, S, H)
    v = kv[:, :, H:2 * H]                                         # (B, S, H)

    # Q only for the single query row that reaches the pooler (16x fewer Q FLOPs).
    q = (jnp.dot(q0_ref[...], w_ref[0:H, _C_Q:_C_Q + H],
                 preferred_element_type=jnp.float32)
         + w_ref[H:H + 1, _C_Q:_C_Q + H])                         # (B, H)

    # ---- key-padding bias, built in-kernel (no mask input DMA) --------------
    # The qa keys are the ORIGINAL tokens 1..sep0-1; softmax is invariant to the
    # key relabelling, so no shifted qa_seq copy is ever materialised.
    # A fully-masked row (sep0 == 1) gives a uniform distribution instead of
    # torch's NaN propagation (documented divergence).  -1e30 is f32-only; keep
    # the guard if dtypes ever change.
    kidx = jax.lax.broadcasted_iota(jnp.int32, (B, S, nh), 1)
    bias = jnp.where((kidx >= 1) & (kidx < sep_ref[...]), 0.0, -1e30)   # (B,S,nh)

    # ---- all heads at once (no dh=8 lane-slice loop) ------------------------
    # Head-indicator matrices built from iota (no extra input DMA):
    #   e_mat[c,h] = 1 iff lane c belongs to head h;  e_mat_t = e_mat.T.
    lane = jax.lax.broadcasted_iota(jnp.int32, (H, nh), 0)
    head = jax.lax.broadcasted_iota(jnp.int32, (H, nh), 1) * dh
    e_mat = ((lane >= head) & (lane < head + dh)).astype(jnp.float32)    # (H, nh)
    lane_t = jax.lax.broadcasted_iota(jnp.int32, (nh, H), 1)
    head_t = jax.lax.broadcasted_iota(jnp.int32, (nh, H), 0) * dh
    e_mat_t = ((lane_t >= head_t) & (lane_t < head_t + dh)).astype(jnp.float32)

    # Scores s[b,k,h]: VPU broadcast-multiply + ONE small segmented-sum dot
    # (keeps the depth-8 contraction off a per-head MXU push/pop path).
    prod = q[:, None, :] * k                                      # (B, S, H)  VPU
    s = jnp.dot(prod.reshape(B * S, H), e_mat,
                preferred_element_type=jnp.float32)               # (B*S, nh)
    s = s.reshape(B, S, nh) * scale + bias                        # (B, S, nh)

    # Softmax over keys (axis=1) for all heads together.  Exact divide: free at
    # this size and keeps the result bit-close to the reference.
    s_max = jnp.max(s, axis=1, keepdims=True)
    p = jnp.exp(s - s_max)
    attn = p / jnp.sum(p, axis=1, keepdims=True)                  # (B, S, nh)

    # Context for query row 0: expand head weights back to H lanes (one small
    # dot), weight V, reduce over keys.
    attn_exp = jnp.dot(attn.reshape(B * S, nh), e_mat_t,
                       preferred_element_type=jnp.float32)        # (B*S, H)
    ctx = jnp.sum((attn_exp * v.reshape(B * S, H)).reshape(B, S, H), axis=1)  # (B, H)

    # Output projection (row 0 only) == enc_output_qa[:, 0, :].
    out0 = (jnp.dot(ctx, w_ref[0:H, _C_O:_C_O + H],
                    preferred_element_type=jnp.float32)
            + w_ref[H:H + 1, _C_O:_C_O + H])                      # (B, H)

    # BertPooler (dense + tanh; dropout(p=0.5) is identity at eval) + classifier.
    pooled = jnp.tanh(jnp.dot(out0, w_ref[0:H, _C_P:_C_P + H],
                              preferred_element_type=jnp.float32)
                      + w_ref[H:H + 1, _C_P:_C_P + H])            # (B, H)
    logits = (jnp.dot(pooled, w_ref[0:H, _C_C:_C_C + 1],
                      preferred_element_type=jnp.float32)
              + w_ref[H:H + 1, _C_C:_C_C + 1])                    # (B, 1)

    # (B,1) store kept as-is: at B=10 it is 1-2 masked vsts; a lane-dense (1,B)
    # row would need an equivalent-size in-kernel relayout — a wash.
    out_ref[...] = logits


def _full_spec(shape):
    n = len(shape)
    return pl.BlockSpec(shape, lambda i, _n=n: (0,) * _n)


def duma_logits_pallas(x, q0, sep0, packed_params):
    """One fused pallas_call: attn_qa(row 0) -> pooler -> classifier (grid=(1,))."""
    B, S, H = x.shape
    kernel = functools.partial(_duma_fused_kernel, nh=NUM_HEADS, dh=HEAD_DIM)
    args = (x, q0, sep0, packed_params)
    return pl.pallas_call(
        kernel,
        out_shape=jax.ShapeDtypeStruct((B, 1), jnp.float32),
        grid=(1,),
        in_specs=[_full_spec(a.shape) for a in args],
        out_specs=_full_spec((B, 1)),
        compiler_params=pltpu.CompilerParams(
            dimension_semantics=("arbitrary",)),
    )(*args)


# ---------------------------------------------------------------------------
# One-time parameter prep (outside the hot path): no per-call `.T`, one slab.
# ---------------------------------------------------------------------------
def pack_duma_params(params):
    """Pack every weight/bias the forward consumes into one lane-dense
    (H+1, 6H) f32 slab.  Rows 0:H = transposed weights, row H = biases."""
    H = HIDDEN
    a = params["attn_qa"]
    w = jnp.zeros((H + 1, _SLAB_COLS), jnp.float32)
    w = w.at[:H, _C_Q:_C_Q + H].set(a["wq"].T)
    w = w.at[:H, _C_KV:_C_KV + H].set(a["wk"].T)
    w = w.at[:H, _C_KV + H:_C_KV + 2 * H].set(a["wv"].T)
    w = w.at[:H, _C_O:_C_O + H].set(a["wo"].T)
    w = w.at[:H, _C_P:_C_P + H].set(params["wp"].T)
    w = w.at[:H, _C_C:_C_C + 1].set(params["wc"].T)
    b = jnp.concatenate([a["bq"], a["bk"], a["bv"], a["bo"],
                         params["bp"], params["bc"]], axis=1)      # (1, 5H+1)
    w = w.at[H:H + 1, 0:b.shape[1]].set(b)
    return w


# ---------------------------------------------------------------------------
# Full DUMA forward (post-BERT)
# ---------------------------------------------------------------------------
@jax.jit
def duma_forward(input_ids, token_type_ids, attention_mask, last_hidden_state,
                 packed_params):
    """Only attn_qa(query=p, key/value=qa) row 0 ever reaches the model output
    (fused_output = cat([enc_qa, enc_p], dim=1); BertPooler reads token 0 only),
    so the wrapper prepares just q0 = last_hidden_state[b, sep0+1] and sep0.
    Neither qa_seq nor p_seq is materialised; attn_p is dead work and skipped."""
    del token_type_ids, attention_mask  # only consumed by the (skipped) BERT encoder
    B, S, H = last_hidden_state.shape

    idx = jnp.arange(S)
    is_sep = (input_ids == 2)
    sep0 = jnp.argmax(is_sep, axis=1)                                   # first SEP
    sep1 = jnp.argmax(is_sep & (idx[None, :] > sep0[:, None]), axis=1)  # second SEP

    # token 0 of the p segment — the only query the pooler consumes.
    q_idx = jnp.minimum(sep0 + 1, S - 1)
    q0 = jnp.take_along_axis(
        last_hidden_state,
        jnp.broadcast_to(q_idx[:, None, None], (B, 1, H)), axis=1)[:, 0, :]
    q0 = jnp.where((sep1 > sep0 + 1)[:, None], q0, 0.0)   # empty p segment -> zeros

    sep0_k = sep0.astype(jnp.int32).reshape(B, 1, 1)

    logits = duma_logits_pallas(last_hidden_state, q0, sep0_k, packed_params)

    # Label softmax over NUM_LABELS choices: a (N_EXAMPLES, 5) op kept in plain
    # JAX to avoid an in-kernel lane-dim-changing reshape / an extra dispatch.
    return jax.nn.softmax(logits.reshape(-1, NUM_LABELS), axis=-1)


# ---------------------------------------------------------------------------
# Pure-JAX reference: full transcription of the PyTorch forward (both attentions,
# concat, pooler, classifier) — validates the dead-code-elimination reasoning too.
# ---------------------------------------------------------------------------
def separate_seq2_jax(sequence_output, flat_input_ids):
    B, S, H = sequence_output.shape
    idx = jnp.arange(S)
    is_sep = (flat_input_ids == 2)
    sep0 = jnp.argmax(is_sep, axis=1)                                  # first SEP
    is_sep2 = is_sep & (idx[None, :] > sep0[:, None])
    sep1 = jnp.argmax(is_sep2, axis=1)                                 # second SEP

    j = idx[None, :]                                                   # (1, S)

    # qa segment: tokens 1 .. sep0-1  ->  positions 0 .. sep0-2
    qa_valid = j < (sep0 - 1)[:, None]
    qa_gidx = jnp.clip(j + 1, 0, S - 1)
    qa_g = jnp.take_along_axis(
        sequence_output, jnp.broadcast_to(qa_gidx[:, :, None], (B, S, H)), axis=1)
    qa_seq = jnp.where(qa_valid[:, :, None], qa_g, 0.0)
    qa_mask = ~qa_valid                                                # True = padded

    # p segment: tokens sep0+1 .. sep1-1 -> positions 0 .. sep1-sep0-2
    p_valid = j < (sep1 - sep0 - 1)[:, None]
    p_gidx = jnp.clip(sep0[:, None] + 1 + j, 0, S - 1)
    p_g = jnp.take_along_axis(
        sequence_output, jnp.broadcast_to(p_gidx[:, :, None], (B, S, H)), axis=1)
    p_seq = jnp.where(p_valid[:, :, None], p_g, 0.0)
    p_mask = ~p_valid
    return qa_seq, p_seq, qa_mask, p_mask


def _mha_ref(q_seq, kv_seq, key_mask, p):
    B, S, H = q_seq.shape
    dh = HEAD_DIM
    q = q_seq @ p["wq"].T + p["bq"]
    k = kv_seq @ p["wk"].T + p["bk"]
    v = kv_seq @ p["wv"].T + p["bv"]
    qh = q.reshape(B, S, NUM_HEADS, dh).transpose(0, 2, 1, 3)
    kh = k.reshape(B, S, NUM_HEADS, dh).transpose(0, 2, 1, 3)
    vh = v.reshape(B, S, NUM_HEADS, dh).transpose(0, 2, 1, 3)
    scores = (qh @ kh.transpose(0, 1, 3, 2)) / (dh ** 0.5)
    scores = scores + key_mask.astype(jnp.float32)[:, None, None, :] * (-1e30)
    attn = jax.nn.softmax(scores, axis=-1)
    ctx = (attn @ vh).transpose(0, 2, 1, 3).reshape(B, S, H)
    return ctx @ p["wo"].T + p["bo"]


def duma_forward_ref(input_ids, last_hidden_state, params):
    qa_seq, p_seq, qa_mask, p_mask = separate_seq2_jax(last_hidden_state, input_ids)
    enc_qa = _mha_ref(p_seq, qa_seq, qa_mask, params["attn_qa"])
    enc_p = _mha_ref(qa_seq, p_seq, p_mask, params["attn_p"])
    fused = jnp.concatenate([enc_qa, enc_p], axis=1)
    first_tok = fused[:, 0, :]                                         # == enc_qa[:, 0]
    pooled = jnp.tanh(first_tok @ params["wp"].T + params["bp"])
    logits = pooled @ params["wc"].T + params["bc"]
    return jax.nn.softmax(logits.reshape(-1, NUM_LABELS), axis=-1)


# ---------------------------------------------------------------------------
def init_params(key):
    def nrm(k, shape, scale=0.05):
        return (scale * jax.random.normal(k, shape)).astype(jnp.float32)

    keys = jax.random.split(key, 20)

    def mha_params(ks):
        return {"wq": nrm(ks[0], (HIDDEN, HIDDEN)), "bq": nrm(ks[1], (1, HIDDEN)),
                "wk": nrm(ks[2], (HIDDEN, HIDDEN)), "bk": nrm(ks[3], (1, HIDDEN)),
                "wv": nrm(ks[4], (HIDDEN, HIDDEN)), "bv": nrm(ks[5], (1, HIDDEN)),
                "wo": nrm(ks[6], (HIDDEN, HIDDEN)), "bo": nrm(ks[7], (1, HIDDEN))}

    return {
        "attn_qa": mha_params(keys[0:8]),
        # attn_p weights exist in the PyTorch module but never reach the model
        # output (pooler reads token 0 of the fused concat) — kept for parameter-
        # structure fidelity, used only by the pure-JAX reference.
        "attn_p": mha_params(keys[8:16]),
        "wp": nrm(keys[16], (HIDDEN, HIDDEN)), "bp": nrm(keys[17], (1, HIDDEN)),
        "wc": nrm(keys[18], (1, HIDDEN)), "bc": nrm(keys[19], (1, 1)),
    }


if __name__ == "__main__":
    key = jax.random.PRNGKey(0)
    k_param, k_hidden = jax.random.split(key)

    params = init_params(k_param)
    packed_params = pack_duma_params(params)      # one-time prep, not per call

    # Deterministic input_ids with exactly two SEP tokens (id == 2) per row.
    idx = jnp.arange(SEQ)
    sep0 = jnp.array([5, 6, 7, 5, 6, 7, 5, 6, 7, 6], dtype=jnp.int32)
    sep1 = jnp.array([11, 12, 13, 12, 11, 13, 12, 11, 13, 12], dtype=jnp.int32)
    ids = 3 + (jnp.arange(BATCH)[:, None] * 7 + idx[None, :] * 3) % 90
    ids = jnp.where(idx[None, :] == sep0[:, None], 2, ids)
    ids = jnp.where(idx[None, :] == sep1[:, None], 2, ids)
    ids = ids.at[:, 0].set(0)
    input_ids = ids.astype(jnp.int32)                               # (B, S)
    token_type_ids = jnp.zeros_like(input_ids)
    attention_mask = jnp.ones_like(input_ids)

    # Synthetic BERT output (stand-in for self.bert(...).last_hidden_state).
    last_hidden_state = jax.random.normal(
        k_hidden, (BATCH, SEQ, HIDDEN), dtype=jnp.float32)

    probs = duma_forward(input_ids, token_type_ids, attention_mask,
                         last_hidden_state, packed_params)
    probs = jax.block_until_ready(probs)

    ref = duma_forward_ref(input_ids, last_hidden_state, params)
    assert probs.shape == (N_EXAMPLES, NUM_LABELS)
    assert bool(jnp.allclose(probs, ref, rtol=1e-4, atol=1e-5)), "mismatch vs reference"
    assert bool(jnp.allclose(jnp.sum(probs, axis=-1), 1.0, atol=1e-5))

    print("KERNEL_OK")
</pallas_src>

<mosaic_0001>
module attributes {stable_mosaic.version = 11 : i64} {
  func.func @_duma_fused_kernel(%arg0: i32, %arg1: memref<10x16x32xf32, #tpu.memory_space<vmem>>, %arg2: memref<10x32xf32, #tpu.memory_space<vmem>>, %arg3: memref<10x1x1xi32, #tpu.memory_space<vmem>>, %arg4: memref<33x192xf32, #tpu.memory_space<vmem>>, %arg5: memref<10x1xf32, #tpu.memory_space<vmem>>) attributes {dimension_semantics = [#tpu.dimension_semantics<arbitrary>], iteration_bounds = array<i64: 1>, scalar_prefetch = 0 : i64, scratch_operands = 0 : i64, tpu.core_type = #tpu.core_type<tc>, window_params = [{pipeline_mode = #tpu.pipeline_mode<synchronous>, transform_indices = @transform_0, window_bounds = array<i64: 10, 16, 32>}, {pipeline_mode = #tpu.pipeline_mode<synchronous>, transform_indices = @transform_1, window_bounds = array<i64: 10, 32>}, {pipeline_mode = #tpu.pipeline_mode<synchronous>, transform_indices = @transform_2, window_bounds = array<i64: 10, 1, 1>}, {pipeline_mode = #tpu.pipeline_mode<synchronous>, transform_indices = @transform_3, window_bounds = array<i64: 33, 192>}, {pipeline_mode = #tpu.pipeline_mode<synchronous>, transform_indices = @transform_4, window_bounds = array<i64: 10, 1>}]} {
    %c0 = arith.constant 0 : index
    %c0_0 = arith.constant 0 : index
    %c0_1 = arith.constant 0 : index
    %0 = vector.load %arg1[%c0, %c0_0, %c0_1] : memref<10x16x32xf32, #tpu.memory_space<vmem>>, vector<10x16x32xf32>
    %1 = vector.shape_cast %0 : vector<10x16x32xf32> to vector<160x32xf32>
    %c0_2 = arith.constant 0 : index
    %c32 = arith.constant 32 : index
    %2 = vector.load %arg4[%c0_2, %c32] : memref<33x192xf32, #tpu.memory_space<vmem>>, vector<32x64xf32>
    %cst = arith.constant dense<0.000000e+00> : vector<160x64xf32>
    %3 = tpu.matmul %1, %2, %cst {dimension_numbers = #tpu.dot_dimension_numbers<[1], [0], [0], [1], [0, 0, 1, 1], [], []>} : vector<160x32xf32>, vector<32x64xf32>, vector<160x64xf32> -> vector<160x64xf32>
    %c32_3 = arith.constant 32 : index
    %c32_4 = arith.constant 32 : index
    %4 = vector.load %arg4[%c32_3, %c32_4] : memref<33x192xf32, #tpu.memory_space<vmem>>, vector<1x64xf32>
    %5 = vector.broadcast %4 : vector<1x64xf32> to vector<160x64xf32>
    %6 = arith.addf %3, %5 : vector<160x64xf32>
    %7 = vector.shape_cast %6 : vector<160x64xf32> to vector<10x16x64xf32>
    %8 = vector.extract_strided_slice %7 {offsets = [0, 0, 0], sizes = [10, 16, 32], strides = [1, 1, 1]} : vector<10x16x64xf32> to vector<10x16x32xf32>
    %9 = vector.extract_strided_slice %7 {offsets = [0, 0, 32], sizes = [10, 16, 32], strides = [1, 1, 1]} : vector<10x16x64xf32> to vector<10x16x32xf32>
    %c0_5 = arith.constant 0 : index
    %c0_6 = arith.constant 0 : index
    %10 = vector.load %arg2[%c0_5, %c0_6] : memref<10x32xf32, #tpu.memory_space<vmem>>, vector<10x32xf32>
    %c0_7 = arith.constant 0 : index
    %c0_8 = arith.constant 0 : index
    %11 = vector.load %arg4[%c0_7, %c0_8] : memref<33x192xf32, #tpu.memory_space<vmem>>, vector<32x32xf32>
    %cst_9 = arith.constant dense<0.000000e+00> : vector<10x32xf32>
    %12 = tpu.matmul %10, %11, %cst_9 {dimension_numbers = #tpu.dot_dimension_numbers<[1], [0], [0], [1], [0, 0, 1, 1], [], []>} : vector<10x32xf32>, vector<32x32xf32>, vector<10x32xf32> -> vector<10x32xf32>
    %c32_10 = arith.constant 32 : index
    %c0_11 = arith.constant 0 : index
    %13 = vector.load %arg4[%c32_10, %c0_11] : memref<33x192xf32, #tpu.memory_space<vmem>>, vector<1x32xf32>
    %14 = vector.broadcast %13 : vector<1x32xf32> to vector<10x32xf32>
    %15 = arith.addf %12, %14 : vector<10x32xf32>
    %16 = tpu.iota {dimensions = array<i32: 1>} : vector<10x16x4xi32>
    %c1_i32 = arith.constant 1 : i32
    %17 = vector.broadcast %c1_i32 : i32 to vector<10x16x4xi32>
    %18 = arith.cmpi sge, %16, %17 : vector<10x16x4xi32>
    %c0_12 = arith.constant 0 : index
    %c0_13 = arith.constant 0 : index
    %c0_14 = arith.constant 0 : index
    %19 = vector.load %arg3[%c0_12, %c0_13, %c0_14] : memref<10x1x1xi32, #tpu.memory_space<vmem>>, vector<10x1x1xi32>
    %20 = vector.broadcast %19 : vector<10x1x1xi32> to vector<10x16x4xi32>
    %21 = arith.cmpi slt, %16, %20 : vector<10x16x4xi32>
    %22 = arith.andi %18, %21 : vector<10x16x4xi1>
    %cst_15 = arith.constant 0.000000e+00 : f32
    %cst_16 = arith.constant -1.000000e+30 : f32
    %23 = vector.broadcast %cst_15 : f32 to vector<10x16x4xf32>
    %24 = vector.broadcast %cst_16 : f32 to vector<10x16x4xf32>
    %25 = arith.select %22, %23, %24 : vector<10x16x4xi1>, vector<10x16x4xf32>
    %26 = tpu.iota {dimensions = array<i32: 0>} : vector<32x4xi32>
    %27 = tpu.iota {dimensions = array<i32: 1>} : vector<32x4xi32>
    %c8_i32 = arith.constant 8 : i32
    %28 = vector.broadcast %c8_i32 : i32 to vector<32x4xi32>
    %29 = arith.muli %27, %28 : vector<32x4xi32>
    %30 = arith.cmpi sge, %26, %29 : vector<32x4xi32>
    %c8_i32_17 = arith.constant 8 : i32
    %31 = vector.broadcast %c8_i32_17 : i32 to vector<32x4xi32>
    %32 = arith.addi %29, %31 : vector<32x4xi32>
    %33 = arith.cmpi slt, %26, %32 : vector<32x4xi32>
    %34 = arith.andi %30, %33 : vector<32x4xi1>
    %35 = arith.extui %34 : vector<32x4xi1> to vector<32x4xi32>
    %36 = arith.sitofp %35 : vector<32x4xi32> to vector<32x4xf32>
    %37 = tpu.iota {dimensions = array<i32: 1>} : vector<4x32xi32>
    %38 = tpu.iota {dimensions = array<i32: 0>} : vector<4x32xi32>
    %c8_i32_18 = arith.constant 8 : i32
    %39 = vector.broadcast %c8_i32_18 : i32 to vector<4x32xi32>
    %40 = arith.muli %38, %39 : vector<4x32xi32>
    %41 = arith.cmpi sge, %37, %40 : vector<4x32xi32>
    %c8_i32_19 = arith.constant 8 : i32
    %42 = vector.broadcast %c8_i32_19 : i32 to vector<4x32xi32>
    %43 = arith.addi %40, %42 : vector<4x32xi32>
    %44 = arith.cmpi slt, %37, %43 : vector<4x32xi32>
    %45 = arith.andi %41, %44 : vector<4x32xi1>
    %46 = arith.extui %45 : vector<4x32xi1> to vector<4x32xi32>
    %47 = arith.sitofp %46 : vector<4x32xi32> to vector<4x32xf32>
    %48 = vector.shape_cast %15 : vector<10x32xf32> to vector<10x1x32xf32>
    %49 = vector.broadcast %48 : vector<10x1x32xf32> to vector<10x16x32xf32>
    %50 = arith.mulf %49, %8 : vector<10x16x32xf32>
    %51 = vector.shape_cast %50 : vector<10x16x32xf32> to vector<160x32xf32>
    %cst_20 = arith.constant dense<0.000000e+00> : vector<160x4xf32>
    %52 = tpu.matmul %51, %36, %cst_20 {dimension_numbers = #tpu.dot_dimension_numbers<[1], [0], [0], [1], [0, 0, 1, 1], [], []>} : vector<160x32xf32>, vector<32x4xf32>, vector<160x4xf32> -> vector<160x4xf32>
    %53 = vector.shape_cast %52 : vector<160x4xf32> to vector<10x16x4xf32>
    %cst_21 = arith.constant 0.353553385 : f32
    %54 = vector.broadcast %cst_21 : f32 to vector<10x16x4xf32>
    %55 = arith.mulf %53, %54 : vector<10x16x4xf32>
    %56 = arith.addf %55, %25 : vector<10x16x4xf32>
    %cst_22 = arith.constant dense<0xFF800000> : vector<10x4xf32>
    %57 = vector.multi_reduction <maximumf>, %56, %cst_22 [1] : vector<10x16x4xf32> to vector<10x4xf32>
    %58 = vector.shape_cast %57 : vector<10x4xf32> to vector<10x1x4xf32>
    %59 = vector.broadcast %58 : vector<10x1x4xf32> to vector<10x16x4xf32>
    %60 = arith.subf %56, %59 : vector<10x16x4xf32>
    %61 = math.exp %60 : vector<10x16x4xf32>
    %cst_23 = arith.constant dense<0.000000e+00> : vector<10x4xf32>
    %62 = vector.multi_reduction <add>, %61, %cst_23 [1] : vector<10x16x4xf32> to vector<10x4xf32>
    %63 = vector.shape_cast %62 : vector<10x4xf32> to vector<10x1x4xf32>
    %64 = vector.broadcast %63 : vector<10x1x4xf32> to vector<10x16x4xf32>
    %65 = arith.divf %61, %64 : vector<10x16x4xf32>
    %66 = vector.shape_cast %65 : vector<10x16x4xf32> to vector<160x4xf32>
    %cst_24 = arith.constant dense<0.000000e+00> : vector<160x32xf32>
    %67 = tpu.matmul %66, %47, %cst_24 {dimension_numbers = #tpu.dot_dimension_numbers<[1], [0], [0], [1], [0, 0, 1, 1], [], []>} : vector<160x4xf32>, vector<4x32xf32>, vector<160x32xf32> -> vector<160x32xf32>
    %68 = vector.shape_cast %9 : vector<10x16x32xf32> to vector<160x32xf32>
    %69 = arith.mulf %67, %68 : vector<160x32xf32>
    %70 = vector.shape_cast %69 : vector<160x32xf32> to vector<10x16x32xf32>
    %cst_25 = arith.constant dense<0.000000e+00> : vector<10x32xf32>
    %71 = vector.multi_reduction <add>, %70, %cst_25 [1] : vector<10x16x32xf32> to vector<10x32xf32>
    %c0_26 = arith.constant 0 : index
    %c96 = arith.constant 96 : index
    %72 = vector.load %arg4[%c0_26, %c96] : memref<33x192xf32, #tpu.memory_space<vmem>>, vector<32x32xf32>
    %cst_27 = arith.constant dense<0.000000e+00> : vector<10x32xf32>
    %73 = tpu.matmul %71, %72, %cst_27 {dimension_numbers = #tpu.dot_dimension_numbers<[1], [0], [0], [1], [0, 0, 1, 1], [], []>} : vector<10x32xf32>, vector<32x32xf32>, vector<10x32xf32> -> vector<10x32xf32>
    %c32_28 = arith.constant 32 : index
    %c96_29 = arith.constant 96 : index
    %74 = vector.load %arg4[%c32_28, %c96_29] : memref<33x192xf32, #tpu.memory_space<vmem>>, vector<1x32xf32>
    %75 = vector.broadcast %74 : vector<1x32xf32> to vector<10x32xf32>
    %76 = arith.addf %73, %75 : vector<10x32xf32>
    %c0_30 = arith.constant 0 : index
    %c128 = arith.constant 128 : index
    %77 = vector.load %arg4[%c0_30, %c128] : memref<33x192xf32, #tpu.memory_space<vmem>>, vector<32x32xf32>
    %cst_31 = arith.constant dense<0.000000e+00> : vector<10x32xf32>
    %78 = tpu.matmul %76, %77, %cst_31 {dimension_numbers = #tpu.dot_dimension_numbers<[1], [0], [0], [1], [0, 0, 1, 1], [], []>} : vector<10x32xf32>, vector<32x32xf32>, vector<10x32xf32> -> vector<10x32xf32>
    %c32_32 = arith.constant 32 : index
    %c128_33 = arith.constant 128 : index
    %79 = vector.load %arg4[%c32_32, %c128_33] : memref<33x192xf32, #tpu.memory_space<vmem>>, vector<1x32xf32>
    %80 = vector.broadcast %79 : vector<1x32xf32> to vector<10x32xf32>
    %81 = arith.addf %78, %80 : vector<10x32xf32>
    %82 = math.tanh %81 : vector<10x32xf32>
    %c0_34 = arith.constant 0 : index
    %c160 = arith.constant 160 : index
    %83 = vector.load %arg4[%c0_34, %c160] : memref<33x192xf32, #tpu.memory_space<vmem>>, vector<32x1xf32>
    %cst_35 = arith.constant dense<0.000000e+00> : vector<10x1xf32>
    %84 = tpu.matmul %82, %83, %cst_35 {dimension_numbers = #tpu.dot_dimension_numbers<[1], [0], [0], [1], [0, 0, 1, 1], [], []>} : vector<10x32xf32>, vector<32x1xf32>, vector<10x1xf32> -> vector<10x1xf32>
    %c32_36 = arith.constant 32 : index
    %c160_37 = arith.constant 160 : index
    %85 = vector.load %arg4[%c32_36, %c160_37] : memref<33x192xf32, #tpu.memory_space<vmem>>, vector<1x1xf32>
    %86 = vector.broadcast %85 : vector<1x1xf32> to vector<10x1xf32>
    %87 = arith.addf %84, %86 : vector<10x1xf32>
    %c0_38 = arith.constant 0 : index
    %c0_39 = arith.constant 0 : index
    %88 = vector.load %arg5[%c0_38, %c0_39] : memref<10x1xf32, #tpu.memory_space<vmem>>, vector<10x1xf32>
    tpu.vector_store %arg5[%c0_38, %c0_39], %87 {strides = array<i32>} : memref<10x1xf32, #tpu.memory_space<vmem>>, vector<10x1xf32>,
    return
  }
  func.func @transform_0(%arg0: i32) -> (i32, i32, i32) {
    %c0_i32 = arith.constant 0 : i32
    %c0_i32_0 = arith.constant 0 : i32
    %c0_i32_1 = arith.constant 0 : i32
    %c0_i32_2 = arith.constant 0 : i32
    return %c0_i32, %c0_i32_0, %c0_i32_1 : i32, i32, i32
  }
  func.func @transform_1(%arg0: i32) -> (i32, i32) {
    %c0_i32 = arith.constant 0 : i32
    %c0_i32_0 = arith.constant 0 : i32
    %c0_i32_1 = arith.constant 0 : i32
    return %c0_i32, %c0_i32_0 : i32, i32
  }
  func.func @transform_2(%arg0: i32) -> (i32, i32, i32) {
    %c0_i32 = arith.constant 0 : i32
    %c0_i32_0 = arith.constant 0 : i32
    %c0_i32_1 = arith.constant 0 : i32
    %c0_i32_2 = arith.constant 0 : i32
    return %c0_i32, %c0_i32_0, %c0_i32_1 : i32, i32, i32
  }
  func.func @transform_3(%arg0: i32) -> (i32, i32) {
    %c0_i32 = arith.constant 0 : i32
    %c0_i32_0 = arith.constant 0 : i32
    %c0_i32_1 = arith.constant 0 : i32
    return %c0_i32, %c0_i32_0 : i32, i32
  }
  func.func @transform_4(%arg0: i32) -> (i32, i32) {
    %c0_i32 = arith.constant 0 : i32
    %c0_i32_0 = arith.constant 0 : i32
    %c0_i32_1 = arith.constant 0 : i32
    return %c0_i32, %c0_i32_0 : i32, i32
  }
}

</mosaic_0001>

<llo_original>
// kernel: duma_forward.1
$region0: #{duma_forward.1}
  #allocation0 [shape = 'u32[]', space=smem, size = 0x4, offset = 0x4, fixed_abs, tag = 'smem constant byte address 0x4 - core index']
  #allocation1 [shape = 'u32[144,128]{1,0:T(1,128)}', space=vmem, size = 0x12000, scoped, tag = 'internal scratch']
  %s0 = inlined_call_operand.vmem [shape: f32[10,16,32], index: 0, kind: input, shape index: {}]
  %s1 = inlined_call_operand.vmem [shape: f32[10,32], index: 1, kind: input, shape index: {}]
  %s2 = inlined_call_operand.vmem [shape: s32[10,1,1], index: 2, kind: input, shape index: {}]
  %s3 = inlined_call_operand.vmem [shape: f32[33,192], index: 3, kind: input, shape index: {}]
  %s4 = inlined_call_operand.vmem [shape: f32[10,1], index: 4, kind: output, shape index: {}]
  %s5 = sld [smem:[#allocation0]]
  $region26: #{duma_forward.1} parent=0
    _
  %s7 = ssub.s32 1, %s5
  %s8 = scalar_select 0, %s7, %s5
  // Predicated region
  $region2: #{duma_forward.1} parent=0 // pred_check
    _
  $region3: #{duma_forward.1} parent=0 // pred_check_branch
    %10 = sbr.rel (0) target = $region5
  $region4: #{duma_forward.1} parent=0 // pred_region
    _
  $region5: #{duma_forward.1} parent=0 // pred_fallthru
    _
  // Predicated region
  $region6: #{duma_forward.1} parent=0 // pred_check
    _
  $region7: #{duma_forward.1} parent=0 // pred_check_branch
    %12 = sbr.rel (0) target = $region9
  $region8: #{duma_forward.1} parent=0 // pred_region
    _
  $region9: #{duma_forward.1} parent=0 // pred_fallthru
    _
  // Predicated region
  $region10: #{duma_forward.1} parent=0 // pred_check
    _
  $region11: #{duma_forward.1} parent=0 // pred_check_branch
    %14 = sbr.rel (0) target = $region13
  $region12: #{duma_forward.1} parent=0 // pred_region
    _
  $region13: #{duma_forward.1} parent=0 // pred_fallthru
    _
  // Predicated region
  $region14: #{duma_forward.1} parent=0 // pred_check
    _
  $region15: #{duma_forward.1} parent=0 // pred_check_branch
    %16 = sbr.rel (0) target = $region17
  $region16: #{duma_forward.1} parent=0 // pred_region
    _
  $region17: #{duma_forward.1} parent=0 // pred_fallthru
    _
  %v17 = vld [vmem:[%s0] sm:$0xff]
  %v18 = vld [vmem:[%s0 + $0x8] sm:$0xff]
  %v19 = vld [vmem:[%s0 + $0x10] sm:$0xff]
  %v20 = vld [vmem:[%s0 + $0x18] sm:$0xff]
  %v21 = vld [vmem:[%s0 + $0x20] sm:$0xff]
  %v22 = vld [vmem:[%s0 + $0x28] sm:$0xff]
  %v23 = vld [vmem:[%s0 + $0x30] sm:$0xff]
  %v24 = vld [vmem:[%s0 + $0x38] sm:$0xff]
  %v25 = vld [vmem:[%s0 + $0x40] sm:$0xff]
  %v26 = vld [vmem:[%s0 + $0x48] sm:$0xff]
  %v27 = vld [vmem:[%s0 + $0x50] sm:$0xff]
  %v28 = vld [vmem:[%s0 + $0x58] sm:$0xff]
  %v29 = vld [vmem:[%s0 + $0x60] sm:$0xff]
  %v30 = vld [vmem:[%s0 + $0x68] sm:$0xff]
  %v31 = vld [vmem:[%s0 + $0x70] sm:$0xff]
  %v32 = vld [vmem:[%s0 + $0x78] sm:$0xff]
  %v33 = vld [vmem:[%s0 + $0x80] sm:$0xff]
  %v34 = vld [vmem:[%s0 + $0x88] sm:$0xff]
  %v35 = vld [vmem:[%s0 + $0x90] sm:$0xff]
  %v36 = vld [vmem:[%s0 + $0x98] sm:$0xff]
  %v37 = vld [vmem:[%s3] sm:$0xff]
  %v38 = vld [vmem:[%s3 + $0x10] sm:$0xff]
  %v39 = vld [vmem:[%s3 + $0x20] sm:$0xff]
  %v40 = vld [vmem:[%s3 + $0x30] sm:$0xff]
  %v41 = vld [vmem:[%s3 + $0x40] ss:$0 sm:$0xff]
  %46 = vrot.lane.b32.xlu0 %v37, 96
  %v47 = vpop.permute.xlu0 %46
  %48 = vrot.lane.b32.xlu0 %v38, 96
  %v49 = vpop.permute.xlu0 %48
  %50 = vrot.lane.b32.xlu0 %v39, 96
  %v51 = vpop.permute.xlu0 %50
  %52 = vrot.lane.b32.xlu0 %v40, 96
  %v53 = vpop.permute.xlu0 %52
  %59 = vrot.lane.b32.xlu0 %v41, 96
  %v60 = vpop.permute.xlu0 %59
  %vm62 = vcmask 261120
  %v64 = vsel %vm62, %v17, 0
  %v67 = vsel %vm62, %v18, 0
  %v70 = vsel %vm62, %v19, 0
  %v73 = vsel %vm62, %v20, 0
  %v76 = vsel %vm62, %v21, 0
  %v79 = vsel %vm62, %v22, 0
  %v82 = vsel %vm62, %v23, 0
  %v85 = vsel %vm62, %v24, 0
  %v88 = vsel %vm62, %v25, 0
  %v91 = vsel %vm62, %v26, 0
  %v94 = vsel %vm62, %v27, 0
  %v97 = vsel %vm62, %v28, 0
  %v100 = vsel %vm62, %v29, 0
  %v103 = vsel %vm62, %v30, 0
  %v106 = vsel %vm62, %v31, 0
  %v109 = vsel %vm62, %v32, 0
  %v112 = vsel %vm62, %v33, 0
  %v115 = vsel %vm62, %v34, 0
  %v118 = vsel %vm62, %v35, 0
  %v121 = vsel %vm62, %v36, 0
  %123 = vmatprep.subr.mxu0 0.0
  %124 = vmatpush1.msra.mxu0 %v47
  %125 = vmatprep.subr.mxu0 0.0
  %126 = vmatpush1.msra.mxu0 %v49
  %127 = vmatprep.subr.mxu0 0.0
  %128 = vmatpush1.msra.mxu0 %v51
  %129 = vmatprep.subr.mxu0 0.0
  %130 = vmatpush1.msra.mxu0 %v53
  %131 = vmatprep.subr.mxu0 0.0
  %132 = vmatpush1.msra.mxu0 0.0
  %133 = vmatprep.subr.mxu0 0.0
  %134 = vmatpush1.msra.mxu0 0.0
  %135 = vmatprep.subr.mxu0 0.0
  %136 = vmatpush1.msra.mxu0 0.0
  %137 = vmatprep.subr.mxu0 0.0
  %138 = vmatpush1.msra.mxu0 0.0
  %139 = vmatprep.subr.mxu0 0.0
  %140 = vmatpush1.msra.mxu0 0.0
  %141 = vmatprep.subr.mxu0 0.0
  %142 = vmatpush1.msra.mxu0 0.0
  %143 = vmatprep.subr.mxu0 0.0
  %144 = vmatpush1.msra.mxu0 0.0
  %145 = vmatprep.subr.mxu0 0.0
  %146 = vmatpush1.msra.mxu0 0.0
  %147 = vmatprep.subr.mxu0 0.0
  %148 = vmatpush1.msra.mxu0 0.0
  %149 = vmatprep.subr.mxu0 0.0
  %150 = vmatpush1.msra.mxu0 0.0
  %151 = vmatprep.subr.mxu0 0.0
  %152 = vmatpush1.msra.mxu0 0.0
  %153 = vmatprep.subr.mxu0 0.0
  %154 = vmatpush1.msra.mxu0 0.0
  %155 = vmatprep.subr.mxu0 0.0
  %156 = vmatpush1.msra.mxu0 0.0
  %157 = vmatprep.subr.mxu0 0.0
  %158 = vmatpush1.msra.mxu0 0.0
  %159 = vmatprep.subr.mxu0 0.0
  %160 = vmatpush1.msra.mxu0 0.0
  %161 = vmatprep.subr.mxu0 0.0
  %162 = vmatpush1.msra.mxu0 0.0
  %163 = vmatprep.subr.mxu0 0.0
  %164 = vmatpush1.msra.mxu0 0.0
  %165 = vmatprep.subr.mxu0 0.0
  %166 = vmatpush1.msra.mxu0 0.0
  %167 = vmatprep.subr.mxu0 0.0
  %168 = vmatpush1.msra.mxu0 0.0
  %169 = vmatprep.subr.mxu0 0.0
  %170 = vmatpush1.msra.mxu0 0.0
  %171 = vmatprep.subr.mxu0 0.0
  %172 = vmatpush1.msra.mxu0 0.0
  %173 = vmatprep.subr.mxu0 0.0
  %174 = vmatpush1.msra.mxu0 0.0
  %175 = vmatprep.subr.mxu0 0.0
  %176 = vmatpush1.msra.mxu0 0.0
  %177 = vmatprep.subr.mxu0 0.0
  %178 = vmatpush1.msra.mxu0 0.0
  %179 = vmatprep.subr.mxu0 0.0
  %180 = vmatpush1.msra.mxu0 0.0
  %181 = vmatprep.subr.mxu0 0.0
  %182 = vmatpush1.msra.mxu0 0.0
  %183 = vmatprep.subr.mxu0 0.0
  %184 = vmatpush1.msra.mxu0 0.0
  %185 = vmatprep.subr.mxu0 0.0
  %186 = vmatpush1.msra.mxu0 0.0
  %187 = vmatprep.mubr.f32.mxu0 0.0
  %188 = vmatmul.mubr.f32.gmra.mrb[0].mxu0 %v64
  %v189 = vpop.f32.mrb[0].mxu0
  %v190 = vadd.f32 %v60, %v189
  %v191 = vpop.f32.mrb[0].mxu0
  %192 = vmatprep.mubr.f32.mxu0 0.0
  %193 = vmatmul.mubr.f32.gmra.mrb[0].mxu0 %v67
  %v194 = vpop.f32.mrb[0].mxu0
  %v195 = vadd.f32 %v60, %v194
  %v196 = vpop.f32.mrb[0].mxu0
  %197 = vmatprep.mubr.f32.mxu0 0.0
  %198 = vmatmul.mubr.f32.gmra.mrb[0].mxu0 %v70
  %v199 = vpop.f32.mrb[0].mxu0
  %v200 = vadd.f32 %v60, %v199
  %v201 = vpop.f32.mrb[0].mxu0
  %202 = vmatprep.mubr.f32.mxu0 0.0
  %203 = vmatmul.mubr.f32.gmra.mrb[0].mxu0 %v73
  %v204 = vpop.f32.mrb[0].mxu0
  %v205 = vadd.f32 %v60, %v204
  %v206 = vpop.f32.mrb[0].mxu0
  %207 = vmatprep.mubr.f32.mxu0 0.0
  %208 = vmatmul.mubr.f32.gmra.mrb[0].mxu0 %v76
  %v209 = vpop.f32.mrb[0].mxu0
  %v210 = vadd.f32 %v60, %v209
  %v211 = vpop.f32.mrb[0].mxu0
  %212 = vmatprep.mubr.f32.mxu0 0.0
  %213 = vmatmul.mubr.f32.gmra.mrb[0].mxu0 %v79
  %v214 = vpop.f32.mrb[0].mxu0
  %v215 = vadd.f32 %v60, %v214
  %v216 = vpop.f32.mrb[0].mxu0
  %217 = vmatprep.mubr.f32.mxu0 0.0
  %218 = vmatmul.mubr.f32.gmra.mrb[0].mxu0 %v82
  %v219 = vpop.f32.mrb[0].mxu0
  %v220 = vadd.f32 %v60, %v219
  %v221 = vpop.f32.mrb[0].mxu0
  %222 = vmatprep.mubr.f32.mxu0 0.0
  %223 = vmatmul.mubr.f32.gmra.mrb[0].mxu0 %v85
  %v224 = vpop.f32.mrb[0].mxu0
  %v225 = vadd.f32 %v60, %v224
  %v226 = vpop.f32.mrb[0].mxu0
  %227 = vmatprep.mubr.f32.mxu0 0.0
  %228 = vmatmul.mubr.f32.gmra.mrb[0].mxu0 %v88
  %v229 = vpop.f32.mrb[0].mxu0
  %v230 = vadd.f32 %v60, %v229
  %v231 = vpop.f32.mrb[0].mxu0
  %232 = vmatprep.mubr.f32.mxu0 0.0
  %233 = vmatmul.mubr.f32.gmra.mrb[0].mxu0 %v91
  %v234 = vpop.f32.mrb[0].mxu0
  %v235 = vadd.f32 %v60, %v234
  %v236 = vpop.f32.mrb[0].mxu0
  %237 = vmatprep.mubr.f32.mxu0 0.0
  %238 = vmatmul.mubr.f32.gmra.mrb[0].mxu0 %v94
  %v239 = vpop.f32.mrb[0].mxu0
  %v240 = vadd.f32 %v60, %v239
  %v241 = vpop.f32.mrb[0].mxu0
  %242 = vmatprep.mubr.f32.mxu0 0.0
  %243 = vmatmul.mubr.f32.gmra.mrb[0].mxu0 %v97
  %v244 = vpop.f32.mrb[0].mxu0
  %v245 = vadd.f32 %v60, %v244
  %v246 = vpop.f32.mrb[0].mxu0
  %247 = vmatprep.mubr.f32.mxu0 0.0
  %248 = vmatmul.mubr.f32.gmra.mrb[0].mxu0 %v100
  %v249 = vpop.f32.mrb[0].mxu0
  %v250 = vadd.f32 %v60, %v249
  %v251 = vpop.f32.mrb[0].mxu0
  %252 = vmatprep.mubr.f32.mxu0 0.0
  %253 = vmatmul.mubr.f32.gmra.mrb[0].mxu0 %v103
  %v254 = vpop.f32.mrb[0].mxu0
  %v255 = vadd.f32 %v60, %v254
  %v256 = vpop.f32.mrb[0].mxu0
  %257 = vmatprep.mubr.f32.mxu0 0.0
  %258 = vmatmul.mubr.f32.gmra.mrb[0].mxu0 %v106
  %v259 = vpop.f32.mrb[0].mxu0
  %v260 = vadd.f32 %v60, %v259
  %v261 = vpop.f32.mrb[0].mxu0
  %262 = vmatprep.mubr.f32.mxu0 0.0
  %263 = vmatmul.mubr.f32.gmra.mrb[0].mxu0 %v109
  %v264 = vpop.f32.mrb[0].mxu0
  %v265 = vadd.f32 %v60, %v264
  %v266 = vpop.f32.mrb[0].mxu0
  %267 = vmatprep.mubr.f32.mxu0 0.0
  %268 = vmatmul.mubr.f32.gmra.mrb[0].mxu0 %v112
  %v269 = vpop.f32.mrb[0].mxu0
  %v270 = vadd.f32 %v60, %v269
  %v271 = vpop.f32.mrb[0].mxu0
  %272 = vmatprep.mubr.f32.mxu0 0.0
  %273 = vmatmul.mubr.f32.gmra.mrb[0].mxu0 %v115
  %v274 = vpop.f32.mrb[0].mxu0
  %v275 = vadd.f32 %v60, %v274
  %v276 = vpop.f32.mrb[0].mxu0
  %277 = vmatprep.mubr.f32.mxu0 0.0
  %278 = vmatmul.mubr.f32.gmra.mrb[0].mxu0 %v118
  %v279 = vpop.f32.mrb[0].mxu0
  %v280 = vadd.f32 %v60, %v279
  %v281 = vpop.f32.mrb[0].mxu0
  %282 = vmatprep.mubr.f32.mxu0 0.0
  %283 = vmatmul.mubr.f32.gmra.mrb[0].mxu0 %v121
  %v284 = vpop.f32.mrb[0].mxu0
  %v285 = vadd.f32 %v60, %v284
  %v286 = vpop.f32.mrb[0].mxu0
  %287 = vdwg.mxu0
  %v288 = vld [vmem:[%s1] sm:$0xff]
  %v289 = vld [vmem:[%s1 + $0x8] sm:$0x3]
  %v291 = vsel %vm62, %v288, 0
  %v294 = vsel %vm62, %v289, 0
  %296 = vmatprep.subr.mxu0 0.0
  %297 = vmatpush1.msra.mxu0 %v37
  %298 = vmatprep.subr.mxu0 0.0
  %299 = vmatpush1.msra.mxu0 %v38
  %300 = vmatprep.subr.mxu0 0.0
  %301 = vmatpush1.msra.mxu0 %v39
  %302 = vmatprep.subr.mxu0 0.0
  %303 = vmatpush1.msra.mxu0 %v40
  %304 = vmatprep.subr.mxu0 0.0
  %305 = vmatpush1.msra.mxu0 0.0
  %306 = vmatprep.subr.mxu0 0.0
  %307 = vmatpush1.msra.mxu0 0.0
  %308 = vmatprep.subr.mxu0 0.0
  %309 = vmatpush1.msra.mxu0 0.0
  %310 = vmatprep.subr.mxu0 0.0
  %311 = vmatpush1.msra.mxu0 0.0
  %312 = vmatprep.subr.mxu0 0.0
  %313 = vmatpush1.msra.mxu0 0.0
  %314 = vmatprep.subr.mxu0 0.0
  %315 = vmatpush1.msra.mxu0 0.0
  %316 = vmatprep.subr.mxu0 0.0
  %317 = vmatpush1.msra.mxu0 0.0
  %318 = vmatprep.subr.mxu0 0.0
  %319 = vmatpush1.msra.mxu0 0.0
  %320 = vmatprep.subr.mxu0 0.0
  %321 = vmatpush1.msra.mxu0 0.0
  %322 = vmatprep.subr.mxu0 0.0
  %323 = vmatpush1.msra.mxu0 0.0
  %324 = vmatprep.subr.mxu0 0.0
  %325 = vmatpush1.msra.mxu0 0.0
  %326 = vmatprep.subr.mxu0 0.0
  %327 = vmatpush1.msra.mxu0 0.0
  %328 = vmatprep.subr.mxu0 0.0
  %329 = vmatpush1.msra.mxu0 0.0
  %330 = vmatprep.subr.mxu0 0.0
  %331 = vmatpush1.msra.mxu0 0.0
  %332 = vmatprep.subr.mxu0 0.0
  %333 = vmatpush1.msra.mxu0 0.0
  %334 = vmatprep.subr.mxu0 0.0
  %335 = vmatpush1.msra.mxu0 0.0
  %336 = vmatprep.subr.mxu0 0.0
  %337 = vmatpush1.msra.mxu0 0.0
  %338 = vmatprep.subr.mxu0 0.0
  %339 = vmatpush1.msra.mxu0 0.0
  %340 = vmatprep.subr.mxu0 0.0
  %341 = vmatpush1.msra.mxu0 0.0
  %342 = vmatprep.subr.mxu0 0.0
  %343 = vmatpush1.msra.mxu0 0.0
  %344 = vmatprep.subr.mxu0 0.0
  %345 = vmatpush1.msra.mxu0 0.0
  %346 = vmatprep.subr.mxu0 0.0
  %347 = vmatpush1.msra.mxu0 0.0
  %348 = vmatprep.subr.mxu0 0.0
  %349 = vmatpush1.msra.mxu0 0.0
  %350 = vmatprep.subr.mxu0 0.0
  %351 = vmatpush1.msra.mxu0 0.0
  %352 = vmatprep.subr.mxu0 0.0
  %353 = vmatpush1.msra.mxu0 0.0
  %354 = vmatprep.subr.mxu0 0.0
  %355 = vmatpush1.msra.mxu0 0.0
  %356 = vmatprep.subr.mxu0 0.0
  %357 = vmatpush1.msra.mxu0 0.0
  %358 = vmatprep.subr.mxu0 0.0
  %359 = vmatpush1.msra.mxu0 0.0
  %360 = vmatprep.mubr.f32.mxu0 0.0
  %361 = vmatmul.mubr.f32.gmra.mrb[0].mxu0 %v291
  %v362 = vpop.f32.mrb[0].mxu0
  %v363 = vadd.f32 %v41, %v362
  %v364 = vpop.f32.mrb[0].mxu0
  %365 = vmatprep.mubr.f32.mxu0 0.0
  %366 = vmatmul.mubr.f32.gmra.mrb[0].mxu0 %v294
  %v367 = vpop.f32.mrb[0].mxu0
  %v368 = vadd.f32 %v41, %v367
  %v369 = vpop.f32.mrb[0].mxu0
  %370 = vdwg.mxu0
  %v371 = vlaneseq
  %v372 = vshrl.u32 %v371, 7
  %v373 = vadd.s32 %v372, 8
  %vm374 = vcmp.ge.s32.totalorder %v372, 1
  %vm375 = vcmp.ge.s32.totalorder %v373, 1
  %v376 = vld [vmem:[%s2] sm:$0x1]
  %v377 = vld [vmem:[%s2 + $0x1] sm:$0x1]
  %v378 = vld [vmem:[%s2 + $0x2] sm:$0x1]
  %v379 = vld [vmem:[%s2 + $0x3] sm:$0x1]
  %v380 = vld [vmem:[%s2 + $0x4] sm:$0x1]
  %v381 = vld [vmem:[%s2 + $0x5] sm:$0x1]
  %v382 = vld [vmem:[%s2 + $0x6] sm:$0x1]
  %v383 = vld [vmem:[%s2 + $0x7] sm:$0x1]
  %v384 = vld [vmem:[%s2 + $0x8] sm:$0x1]
  %v385 = vld [vmem:[%s2 + $0x9] sm:$0x1]
  %v386 = vlaneseq
  %v387 = vshrl.u32 %v386, 7
  %v388 = vsub.s32 0, %v387
  %v389 = vrot.slane %v376, %v388
  %v390 = vlaneseq
  %v391 = vshrl.u32 %v390, 7
  %v392 = vsub.s32 0, %v391
  %v393 = vrot.slane %v377, %v392
  %v394 = vlaneseq
  %v395 = vshrl.u32 %v394, 7
  %v396 = vsub.s32 0, %v395
  %v397 = vrot.slane %v378, %v396
  %v398 = vlaneseq
  %v399 = vshrl.u32 %v398, 7
  %v400 = vsub.s32 0, %v399
  %v401 = vrot.slane %v379, %v400
  %v402 = vlaneseq
  %v403 = vshrl.u32 %v402, 7
  %v404 = vsub.s32 0, %v403
  %v405 = vrot.slane %v380, %v404
  %v406 = vlaneseq
  %v407 = vshrl.u32 %v406, 7
  %v408 = vsub.s32 0, %v407
  %v409 = vrot.slane %v381, %v408
  %v410 = vlaneseq
  %v411 = vshrl.u32 %v410, 7
  %v412 = vsub.s32 0, %v411
  %v413 = vrot.slane %v382, %v412
  %v414 = vlaneseq
  %v415 = vshrl.u32 %v414, 7
  %v416 = vsub.s32 0, %v415
  %v417 = vrot.slane %v383, %v416
  %v418 = vlaneseq
  %v419 = vshrl.u32 %v418, 7
  %v420 = vsub.s32 0, %v419
  %v421 = vrot.slane %v384, %v420
  %v422 = vlaneseq
  %v423 = vshrl.u32 %v422, 7
  %v424 = vsub.s32 0, %v423
  %v425 = vrot.slane %v385, %v424
  %426 = vset.pattern.permute.xlu0 0
  %427 = vperm.xlu0 %426, %v389
  %v428 = vpop.permute.xlu0 %427
  %429 = vset.pattern.permute.xlu0 0
  %430 = vperm.xlu0 %429, %v393
  %v431 = vpop.permute.xlu0 %430
  %432 = vset.pattern.permute.xlu0 0
  %433 = vperm.xlu0 %432, %v397
  %v434 = vpop.permute.xlu0 %433
  %435 = vset.pattern.permute.xlu0 0
  %436 = vperm.xlu0 %435, %v401
  %v437 = vpop.permute.xlu0 %436
  %438 = vset.pattern.permute.xlu0 0
  %439 = vperm.xlu0 %438, %v405
  %v440 = vpop.permute.xlu0 %439
  %441 = vset.pattern.permute.xlu0 0
  %442 = vperm.xlu0 %441, %v409
  %v443 = vpop.permute.xlu0 %442
  %444 = vset.pattern.permute.xlu0 0
  %445 = vperm.xlu0 %444, %v413
  %v446 = vpop.permute.xlu0 %445
  %447 = vset.pattern.permute.xlu0 0
  %448 = vperm.xlu0 %447, %v417
  %v449 = vpop.permute.xlu0 %448
  %450 = vset.pattern.permute.xlu0 0
  %451 = vperm.xlu0 %450, %v421
  %v452 = vpop.permute.xlu0 %451
  %453 = vset.pattern.permute.xlu0 0
  %454 = vperm.xlu0 %453, %v425
  %v455 = vpop.permute.xlu0 %454
  %vm456 = vcmp.lt.s32.totalorder %v372, %v428
  %vm457 = vcmp.lt.s32.totalorder %v373, %v428
  %vm458 = vcmp.lt.s32.totalorder %v372, %v431
  %vm459 = vcmp.lt.s32.totalorder %v373, %v431
  %vm460 = vcmp.lt.s32.totalorder %v372, %v434
  %vm461 = vcmp.lt.s32.totalorder %v373, %v434
  %vm462 = vcmp.lt.s32.totalorder %v372, %v437
  %vm463 = vcmp.lt.s32.totalorder %v373, %v437
  %vm464 = vcmp.lt.s32.totalorder %v372, %v440
  %vm465 = vcmp.lt.s32.totalorder %v373, %v440
  %vm466 = vcmp.lt.s32.totalorder %v372, %v443
  %vm467 = vcmp.lt.s32.totalorder %v373, %v443
  %vm468 = vcmp.lt.s32.totalorder %v372, %v446
  %vm469 = vcmp.lt.s32.totalorder %v373, %v446
  %vm470 = vcmp.lt.s32.totalorder %v372, %v449
  %vm471 = vcmp.lt.s32.totalorder %v373, %v449
  %vm472 = vcmp.lt.s32.totalorder %v372, %v452
  %vm473 = vcmp.lt.s32.totalorder %v373, %v452
  %vm474 = vcmp.lt.s32.totalorder %v372, %v455
  %vm475 = vcmp.lt.s32.totalorder %v373, %v455
  %vm476 = vmand %vm374, %vm456
  %vm477 = vmand %vm375, %vm457
  %vm478 = vmand %vm374, %vm458
  %vm479 = vmand %vm375, %vm459
  %vm480 = vmand %vm374, %vm460
  %vm481 = vmand %vm375, %vm461
  %vm482 = vmand %vm374, %vm462
  %vm483 = vmand %vm375, %vm463
  %vm484 = vmand %vm374, %vm464
  %vm485 = vmand %vm375, %vm465
  %vm486 = vmand %vm374, %vm466
  %vm487 = vmand %vm375, %vm467
  %vm488 = vmand %vm374, %vm468
  %vm489 = vmand %vm375, %vm469
  %vm490 = vmand %vm374, %vm470
  %vm491 = vmand %vm375, %vm471
  %vm492 = vmand %vm374, %vm472
  %vm493 = vmand %vm375, %vm473
  %vm494 = vmand %vm374, %vm474
  %vm495 = vmand %vm375, %vm475
  %v496 = vsel %vm476, 0.0, -1e+30
  %v497 = vsel %vm477, 0.0, -1e+30
  %v498 = vsel %vm478, 0.0, -1e+30
  %v499 = vsel %vm479, 0.0, -1e+30
  %v500 = vsel %vm480, 0.0, -1e+30
  %v501 = vsel %vm481, 0.0, -1e+30
  %v502 = vsel %vm482, 0.0, -1e+30
  %v503 = vsel %vm483, 0.0, -1e+30
  %v504 = vsel %vm484, 0.0, -1e+30
  %v505 = vsel %vm485, 0.0, -1e+30
  %v506 = vsel %vm486, 0.0, -1e+30
  %v507 = vsel %vm487, 0.0, -1e+30
  %v508 = vsel %vm488, 0.0, -1e+30
  %v509 = vsel %vm489, 0.0, -1e+30
  %v510 = vsel %vm490, 0.0, -1e+30
  %v511 = vsel %vm491, 0.0, -1e+30
  %v512 = vsel %vm492, 0.0, -1e+30
  %v513 = vsel %vm493, 0.0, -1e+30
  %v514 = vsel %vm494, 0.0, -1e+30
  %v515 = vsel %vm495, 0.0, -1e+30
  %v516 = vadd.s32 %v372, 16
  %v517 = vadd.s32 %v372, 24
  %v518 = vlaneseq
  %v519 = vand.u32 %v518, 127
  %v520 = vmul.u32 %v519, 8
  %vm521 = vcmp.ge.s32.totalorder %v372, %v520
  %vm522 = vcmp.ge.s32.totalorder %v373, %v520
  %vm523 = vcmp.ge.s32.totalorder %v516, %v520
  %vm524 = vcmp.ge.s32.totalorder %v517, %v520
  %v525 = vadd.s32 %v520, 8
  %vm526 = vcmp.lt.s32.totalorder %v372, %v525
  %vm527 = vcmp.lt.s32.totalorder %v373, %v525
  %vm528 = vcmp.lt.s32.totalorder %v516, %v525
  %vm529 = vcmp.lt.s32.totalorder %v517, %v525
  %vm530 = vmand %vm521, %vm526
  %vm531 = vmand %vm522, %vm527
  %vm532 = vmand %vm523, %vm528
  %vm533 = vmand %vm524, %vm529
  %v534 = vsel %vm530, 1, 0
  %v535 = vsel %vm531, 1, 0
  %v536 = vsel %vm532, 1, 0
  %v537 = vsel %vm533, 1, 0
  %v538 = vcvt.s32.f32 %v534
  %v539 = vcvt.s32.f32 %v535
  %v540 = vcvt.s32.f32 %v536
  %v541 = vcvt.s32.f32 %v537
  %v542 = vmul.u32 %v372, 8
  %vm543 = vcmp.ge.s32.totalorder %v519, %v542
  %v544 = vadd.s32 %v542, 8
  %vm545 = vcmp.lt.s32.totalorder %v519, %v544
  %vm546 = vmand %vm543, %vm545
  %v547 = vsel %vm546, 1, 0
  %v548 = vcvt.s32.f32 %v547
  %v551 = vcombine.high %v363, %v363
  %v553 = vunpack.c.l.s4 1966171168
  %v554 = vunpack.c.0.s8 %v553
  %v555 = vlaneseq
  %v556 = vshrl.u32 %v555, 7
  %v557 = vsub.s32 %v554, %v556
  %v558 = vrot.slane %v363, %v557
  %v560 = vunpack.c.l.s4 1966171168
  %v561 = vunpack.c.0.s8 %v560
  %v562 = vlaneseq
  %v563 = vshrl.u32 %v562, 7
  %v564 = vsub.s32 %v561, %v563
  %v565 = vrot.slane %v551, %v564
  %v566 = vcombine.high %v558, %v558
  %v567 = vcombine.high %v565, %v565
  %v569 = vunpack.c.l.s4 1966171168
  %v570 = vunpack.c.0.s8 %v569
  %v571 = vlaneseq
  %v572 = vshrl.u32 %v571, 7
  %v573 = vsub.s32 %v570, %v572
  %v574 = vrot.slane %v558, %v573
  %v576 = vunpack.c.l.s4 1966171168
  %v577 = vunpack.c.0.s8 %v576
  %v578 = vlaneseq
  %v579 = vshrl.u32 %v578, 7
  %v580 = vsub.s32 %v577, %v579
  %v581 = vrot.slane %v565, %v580
  %v583 = vunpack.c.l.s4 1966171168
  %v584 = vunpack.c.0.s8 %v583
  %v585 = vlaneseq
  %v586 = vshrl.u32 %v585, 7
  %v587 = vsub.s32 %v584, %v586
  %v588 = vrot.slane %v566, %v587
  %v590 = vunpack.c.l.s4 1966171168
  %v591 = vunpack.c.0.s8 %v590
  %v592 = vlaneseq
  %v593 = vshrl.u32 %v592, 7
  %v594 = vsub.s32 %v591, %v593
  %v595 = vrot.slane %v567, %v594
  %v596 = vcombine.high %v574, %v574
  %v597 = vcombine.high %v581, %v581
  %v598 = vcombine.high %v588, %v588
  %v599 = vcombine.high %v595, %v595
  %v601 = vunpack.c.l.s4 1966171168
  %v602 = vunpack.c.0.s8 %v601
  %v603 = vlaneseq
  %v604 = vshrl.u32 %v603, 7
  %v605 = vsub.s32 %v602, %v604
  %v606 = vrot.slane %v368, %v605
  %v607 = vcombine.high %v606, %v606
  %v609 = vunpack.c.l.s4 1966171168
  %v610 = vunpack.c.0.s8 %v609
  %v611 = vlaneseq
  %v612 = vshrl.u32 %v611, 7
  %v613 = vsub.s32 %v610, %v612
  %v614 = vrot.slane %v606, %v613
  %v616 = vunpack.c.l.s4 1966171168
  %v617 = vunpack.c.0.s8 %v616
  %v618 = vlaneseq
  %v619 = vshrl.u32 %v618, 7
  %v620 = vsub.s32 %v617, %v619
  %v621 = vrot.slane %v607, %v620
  %v622 = vlaneseq
  %v623 = vshrl.u32 %v622, 7
  %v624 = vsub.s32 0, %v623
  %v625 = vrot.slane %v574, %v624
  %v626 = vlaneseq
  %v627 = vshrl.u32 %v626, 7
  %v628 = vsub.s32 0, %v627
  %v629 = vrot.slane %v588, %v628
  %v630 = vlaneseq
  %v631 = vshrl.u32 %v630, 7
  %v632 = vsub.s32 0, %v631
  %v633 = vrot.slane %v596, %v632
  %v634 = vlaneseq
  %v635 = vshrl.u32 %v634, 7
  %v636 = vsub.s32 0, %v635
  %v637 = vrot.slane %v598, %v636
  %v638 = vlaneseq
  %v639 = vshrl.u32 %v638, 7
  %v640 = vsub.s32 0, %v639
  %v641 = vrot.slane %v581, %v640
  %v642 = vlaneseq
  %v643 = vshrl.u32 %v642, 7
  %v644 = vsub.s32 0, %v643
  %v645 = vrot.slane %v595, %v644
  %v646 = vlaneseq
  %v647 = vshrl.u32 %v646, 7
  %v648 = vsub.s32 0, %v647
  %v649 = vrot.slane %v597, %v648
  %v650 = vlaneseq
  %v651 = vshrl.u32 %v650, 7
  %v652 = vsub.s32 0, %v651
  %v653 = vrot.slane %v599, %v652
  %v654 = vlaneseq
  %v655 = vshrl.u32 %v654, 7
  %v656 = vsub.s32 0, %v655
  %v657 = vrot.slane %v614, %v656
  %v658 = vlaneseq
  %v659 = vshrl.u32 %v658, 7
  %v660 = vsub.s32 0, %v659
  %v661 = vrot.slane %v621, %v660
  %v672 = vmul.f32 %v625, %v190
  %v673 = vmul.f32 %v625, %v195
  %v674 = vmul.f32 %v629, %v200
  %v675 = vmul.f32 %v629, %v205
  %v676 = vmul.f32 %v633, %v210
  %v677 = vmul.f32 %v633, %v215
  %v678 = vmul.f32 %v637, %v220
  %v679 = vmul.f32 %v637, %v225
  %v680 = vmul.f32 %v641, %v230
  %v681 = vmul.f32 %v641, %v235
  %v682 = vmul.f32 %v645, %v240
  %v683 = vmul.f32 %v645, %v245
  %v684 = vmul.f32 %v649, %v250
  %v685 = vmul.f32 %v649, %v255
  %v686 = vmul.f32 %v653, %v260
  %v687 = vmul.f32 %v653, %v265
  %v688 = vmul.f32 %v657, %v270
  %v689 = vmul.f32 %v657, %v275
  %v690 = vmul.f32 %v661, %v280
  %v691 = vmul.f32 %v661, %v285
  %v693 = vsel %vm62, %v672, 0
  %v696 = vsel %vm62, %v673, 0
  %v699 = vsel %vm62, %v674, 0
  %v702 = vsel %vm62, %v675, 0
  %v705 = vsel %vm62, %v676, 0
  %v708 = vsel %vm62, %v677, 0
  %v711 = vsel %vm62, %v678, 0
  %v714 = vsel %vm62, %v679, 0
  %v717 = vsel %vm62, %v680, 0
  %v720 = vsel %vm62, %v681, 0
  %v723 = vsel %vm62, %v682, 0
  %v726 = vsel %vm62, %v683, 0
  %v729 = vsel %vm62, %v684, 0
  %v732 = vsel %vm62, %v685, 0
  %v735 = vsel %vm62, %v686, 0
  %v738 = vsel %vm62, %v687, 0
  %v741 = vsel %vm62, %v688, 0
  %v744 = vsel %vm62, %v689, 0
  %v747 = vsel %vm62, %v690, 0
  %v750 = vsel %vm62, %v691, 0
  %752 = vmatprep.subr.mxu0 0.0
  %753 = vmatpush1.msra.mxu0 %v538
  %754 = vmatprep.subr.mxu0 0.0
  %755 = vmatpush1.msra.mxu0 %v539
  %756 = vmatprep.subr.mxu0 0.0
  %757 = vmatpush1.msra.mxu0 %v540
  %758 = vmatprep.subr.mxu0 0.0
  %759 = vmatpush1.msra.mxu0 %v541
  %760 = vmatprep.subr.mxu0 0.0
  %761 = vmatpush1.msra.mxu0 0.0
  %762 = vmatprep.subr.mxu0 0.0
  %763 = vmatpush1.msra.mxu0 0.0
  %764 = vmatprep.subr.mxu0 0.0
  %765 = vmatpush1.msra.mxu0 0.0
  %766 = vmatprep.subr.mxu0 0.0
  %767 = vmatpush1.msra.mxu0 0.0
  %768 = vmatprep.subr.mxu0 0.0
  %769 = vmatpush1.msra.mxu0 0.0
  %770 = vmatprep.subr.mxu0 0.0
  %771 = vmatpush1.msra.mxu0 0.0
  %772 = vmatprep.subr.mxu0 0.0
  %773 = vmatpush1.msra.mxu0 0.0
  %774 = vmatprep.subr.mxu0 0.0
  %775 = vmatpush1.msra.mxu0 0.0
  %776 = vmatprep.subr.mxu0 0.0
  %777 = vmatpush1.msra.mxu0 0.0
  %778 = vmatprep.subr.mxu0 0.0
  %779 = vmatpush1.msra.mxu0 0.0
  %780 = vmatprep.subr.mxu0 0.0
  %781 = vmatpush1.msra.mxu0 0.0
  %782 = vmatprep.subr.mxu0 0.0
  %783 = vmatpush1.msra.mxu0 0.0
  %784 = vmatprep.subr.mxu0 0.0
  %785 = vmatpush1.msra.mxu0 0.0
  %786 = vmatprep.subr.mxu0 0.0
  %787 = vmatpush1.msra.mxu0 0.0
  %788 = vmatprep.subr.mxu0 0.0
  %789 = vmatpush1.msra.mxu0 0.0
  %790 = vmatprep.subr.mxu0 0.0
  %791 = vmatpush1.msra.mxu0 0.0
  %792 = vmatprep.subr.mxu0 0.0
  %793 = vmatpush1.msra.mxu0 0.0
  %794 = vmatprep.subr.mxu0 0.0
  %795 = vmatpush1.msra.mxu0 0.0
  %796 = vmatprep.subr.mxu0 0.0
  %797 = vmatpush1.msra.mxu0 0.0
  %798 = vmatprep.subr.mxu0 0.0
  %799 = vmatpush1.msra.mxu0 0.0
  %800 = vmatprep.subr.mxu0 0.0
  %801 = vmatpush1.msra.mxu0 0.0
  %802 = vmatprep.subr.mxu0 0.0
  %803 = vmatpush1.msra.mxu0 0.0
  %804 = vmatprep.subr.mxu0 0.0
  %805 = vmatpush1.msra.mxu0 0.0
  %806 = vmatprep.subr.mxu0 0.0
  %807 = vmatpush1.msra.mxu0 0.0
  %808 = vmatprep.subr.mxu0 0.0
  %809 = vmatpush1.msra.mxu0 0.0
  %810 = vmatprep.subr.mxu0 0.0
  %811 = vmatpush1.msra.mxu0 0.0
  %812 = vmatprep.subr.mxu0 0.0
  %813 = vmatpush1.msra.mxu0 0.0
  %814 = vmatprep.subr.mxu0 0.0
  %815 = vmatpush1.msra.mxu0 0.0
  %816 = vmatprep.mubr.f32.mxu0 0.0
  %817 = vmatmul.mubr.f32.gmra.mrb[0].mxu0 %v693
  %v818 = vpop.f32.mrb[0].mxu0
  %v819 = vadd.f32 0.0, %v818
  %v820 = vpop.f32.mrb[0].mxu0
  %821 = vmatprep.mubr.f32.mxu0 0.0
  %822 = vmatmul.mubr.f32.gmra.mrb[0].mxu0 %v696
  %v823 = vpop.f32.mrb[0].mxu0
  %v824 = vadd.f32 0.0, %v823
  %v825 = vpop.f32.mrb[0].mxu0
  %826 = vmatprep.mubr.f32.mxu0 0.0
  %827 = vmatmul.mubr.f32.gmra.mrb[0].mxu0 %v699
  %v828 = vpop.f32.mrb[0].mxu0
  %v829 = vadd.f32 0.0, %v828
  %v830 = vpop.f32.mrb[0].mxu0
  %831 = vmatprep.mubr.f32.mxu0 0.0
  %832 = vmatmul.mubr.f32.gmra.mrb[0].mxu0 %v702
  %v833 = vpop.f32.mrb[0].mxu0
  %v834 = vadd.f32 0.0, %v833
  %v835 = vpop.f32.mrb[0].mxu0
  %836 = vmatprep.mubr.f32.mxu0 0.0
  %837 = vmatmul.mubr.f32.gmra.mrb[0].mxu0 %v705
  %v838 = vpop.f32.mrb[0].mxu0
  %v839 = vadd.f32 0.0, %v838
  %v840 = vpop.f32.mrb[0].mxu0
  %841 = vmatprep.mubr.f32.mxu0 0.0
  %842 = vmatmul.mubr.f32.gmra.mrb[0].mxu0 %v708
  %v843 = vpop.f32.mrb[0].mxu0
  %v844 = vadd.f32 0.0, %v843
  %v845 = vpop.f32.mrb[0].mxu0
  %846 = vmatprep.mubr.f32.mxu0 0.0
  %847 = vmatmul.mubr.f32.gmra.mrb[0].mxu0 %v711
  %v848 = vpop.f32.mrb[0].mxu0
  %v849 = vadd.f32 0.0, %v848
  %v850 = vpop.f32.mrb[0].mxu0
  %851 = vmatprep.mubr.f32.mxu0 0.0
  %852 = vmatmul.mubr.f32.gmra.mrb[0].mxu0 %v714
  %v853 = vpop.f32.mrb[0].mxu0
  %v854 = vadd.f32 0.0, %v853
  %v855 = vpop.f32.mrb[0].mxu0
  %856 = vmatprep.mubr.f32.mxu0 0.0
  %857 = vmatmul.mubr.f32.gmra.mrb[0].mxu0 %v717
  %v858 = vpop.f32.mrb[0].mxu0
  %v859 = vadd.f32 0.0, %v858
  %v860 = vpop.f32.mrb[0].mxu0
  %861 = vmatprep.mubr.f32.mxu0 0.0
  %862 = vmatmul.mubr.f32.gmra.mrb[0].mxu0 %v720
  %v863 = vpop.f32.mrb[0].mxu0
  %v864 = vadd.f32 0.0, %v863
  %v865 = vpop.f32.mrb[0].mxu0
  %866 = vmatprep.mubr.f32.mxu0 0.0
  %867 = vmatmul.mubr.f32.gmra.mrb[0].mxu0 %v723
  %v868 = vpop.f32.mrb[0].mxu0
  %v869 = vadd.f32 0.0, %v868
  %v870 = vpop.f32.mrb[0].mxu0
  %871 = vmatprep.mubr.f32.mxu0 0.0
  %872 = vmatmul.mubr.f32.gmra.mrb[0].mxu0 %v726
  %v873 = vpop.f32.mrb[0].mxu0
  %v874 = vadd.f32 0.0, %v873
  %v875 = vpop.f32.mrb[0].mxu0
  %876 = vmatprep.mubr.f32.mxu0 0.0
  %877 = vmatmul.mubr.f32.gmra.mrb[0].mxu0 %v729
  %v878 = vpop.f32.mrb[0].mxu0
  %v879 = vadd.f32 0.0, %v878
  %v880 = vpop.f32.mrb[0].mxu0
  %881 = vmatprep.mubr.f32.mxu0 0.0
  %882 = vmatmul.mubr.f32.gmra.mrb[0].mxu0 %v732
  %v883 = vpop.f32.mrb[0].mxu0
  %v884 = vadd.f32 0.0, %v883
  %v885 = vpop.f32.mrb[0].mxu0
  %886 = vmatprep.mubr.f32.mxu0 0.0
  %887 = vmatmul.mubr.f32.gmra.mrb[0].mxu0 %v735
  %v888 = vpop.f32.mrb[0].mxu0
  %v889 = vadd.f32 0.0, %v888
  %v890 = vpop.f32.mrb[0].mxu0
  %891 = vmatprep.mubr.f32.mxu0 0.0
  %892 = vmatmul.mubr.f32.gmra.mrb[0].mxu0 %v738
  %v893 = vpop.f32.mrb[0].mxu0
  %v894 = vadd.f32 0.0, %v893
  %v895 = vpop.f32.mrb[0].mxu0
  %896 = vmatprep.mubr.f32.mxu0 0.0
  %897 = vmatmul.mubr.f32.gmra.mrb[0].mxu0 %v741
  %v898 = vpop.f32.mrb[0].mxu0
  %v899 = vadd.f32 0.0, %v898
  %v900 = vpop.f32.mrb[0].mxu0
  %901 = vmatprep.mubr.f32.mxu0 0.0
  %902 = vmatmul.mubr.f32.gmra.mrb[0].mxu0 %v744
  %v903 = vpop.f32.mrb[0].mxu0
  %v904 = vadd.f32 0.0, %v903
  %v905 = vpop.f32.mrb[0].mxu0
  %906 = vmatprep.mubr.f32.mxu0 0.0
  %907 = vmatmul.mubr.f32.gmra.mrb[0].mxu0 %v747
  %v908 = vpop.f32.mrb[0].mxu0
  %v909 = vadd.f32 0.0, %v908
  %v910 = vpop.f32.mrb[0].mxu0
  %911 = vmatprep.mubr.f32.mxu0 0.0
  %912 = vmatmul.mubr.f32.gmra.mrb[0].mxu0 %v750
  %v913 = vpop.f32.mrb[0].mxu0
  %v914 = vadd.f32 0.0, %v913
  %v915 = vpop.f32.mrb[0].mxu0
  %916 = vdwg.mxu0
  %v917 = vmul.f32 %v819, 0.35355338
  %v918 = vmul.f32 %v824, 0.35355338
  %v919 = vmul.f32 %v829, 0.35355338
  %v920 = vmul.f32 %v834, 0.35355338
  %v921 = vmul.f32 %v839, 0.35355338
  %v922 = vmul.f32 %v844, 0.35355338
  %v923 = vmul.f32 %v849, 0.35355338
  %v924 = vmul.f32 %v854, 0.35355338
  %v925 = vmul.f32 %v859, 0.35355338
  %v926 = vmul.f32 %v864, 0.35355338
  %v927 = vmul.f32 %v869, 0.35355338
  %v928 = vmul.f32 %v874, 0.35355338
  %v929 = vmul.f32 %v879, 0.35355338
  %v930 = vmul.f32 %v884, 0.35355338
  %v931 = vmul.f32 %v889, 0.35355338
  %v932 = vmul.f32 %v894, 0.35355338
  %v933 = vmul.f32 %v899, 0.35355338
  %v934 = vmul.f32 %v904, 0.35355338
  %v935 = vmul.f32 %v909, 0.35355338
  %v936 = vmul.f32 %v914, 0.35355338
  %v937 = vadd.f32 %v917, %v496
  %v938 = vadd.f32 %v918, %v497
  %v939 = vadd.f32 %v919, %v498
  %v940 = vadd.f32 %v920, %v499
  %v941 = vadd.f32 %v921, %v500
  %v942 = vadd.f32 %v922, %v501
  %v943 = vadd.f32 %v923, %v502
  %v944 = vadd.f32 %v924, %v503
  %v945 = vadd.f32 %v925, %v504
  %v946 = vadd.f32 %v926, %v505
  %v947 = vadd.f32 %v927, %v506
  %v948 = vadd.f32 %v928, %v507
  %v949 = vadd.f32 %v929, %v508
  %v950 = vadd.f32 %v930, %v509
  %v951 = vadd.f32 %v931, %v510
  %v952 = vadd.f32 %v932, %v511
  %v953 = vadd.f32 %v933, %v512
  %v954 = vadd.f32 %v934, %v513
  %v955 = vadd.f32 %v935, %v514
  %v956 = vadd.f32 %v936, %v515
  %vm957 = vcmask 31744
  %v958 = vsel %vm957, %v937, -inf
  %v959 = vsel %vm957, %v938, -inf
  %v960 = vmax.f32 %v958, %v959
  %v961 = vrot.slane %v960, 4
  %v962 = vmax.f32 %v960, %v961
  %v963 = vrot.slane %v962, 2
  %v964 = vmax.f32 %v962, %v963
  %v965 = vrot.slane %v964, 1
  %v966 = vmax.f32 %v964, %v965
  %v967 = vsel %vm957, %v939, -inf
  %v968 = vsel %vm957, %v940, -inf
  %v969 = vmax.f32 %v967, %v968
  %v970 = vrot.slane %v969, 4
  %v971 = vmax.f32 %v969, %v970
  %v972 = vrot.slane %v971, 2
  %v973 = vmax.f32 %v971, %v972
  %v974 = vrot.slane %v973, 1
  %v975 = vmax.f32 %v973, %v974
  %v976 = vsel %vm957, %v941, -inf
  %v977 = vsel %vm957, %v942, -inf
  %v978 = vmax.f32 %v976, %v977
  %v979 = vrot.slane %v978, 4
  %v980 = vmax.f32 %v978, %v979
  %v981 = vrot.slane %v980, 2
  %v982 = vmax.f32 %v980, %v981
  %v983 = vrot.slane %v982, 1
  %v984 = vmax.f32 %v982, %v983
  %v985 = vsel %vm957, %v943, -inf
  %v986 = vsel %vm957, %v944, -inf
  %v987 = vmax.f32 %v985, %v986
  %v988 = vrot.slane %v987, 4
  %v989 = vmax.f32 %v987, %v988
  %v990 = vrot.slane %v989, 2
  %v991 = vmax.f32 %v989, %v990
  %v992 = vrot.slane %v991, 1
  %v993 = vmax.f32 %v991, %v992
  %v994 = vsel %vm957, %v945, -inf
  %v995 = vsel %vm957, %v946, -inf
  %v996 = vmax.f32 %v994, %v995
  %v997 = vrot.slane %v996, 4
  %v998 = vmax.f32 %v996, %v997
  %v999 = vrot.slane %v998, 2
  %v1000 = vmax.f32 %v998, %v999
  %v1001 = vrot.slane %v1000, 1
  %v1002 = vmax.f32 %v1000, %v1001
  %v1003 = vsel %vm957, %v947, -inf
  %v1004 = vsel %vm957, %v948, -inf
  %v1005 = vmax.f32 %v1003, %v1004
  %v1006 = vrot.slane %v1005, 4
  %v1007 = vmax.f32 %v1005, %v1006
  %v1008 = vrot.slane %v1007, 2
  %v1009 = vmax.f32 %v1007, %v1008
  %v1010 = vrot.slane %v1009, 1
  %v1011 = vmax.f32 %v1009, %v1010
  %v1012 = vsel %vm957, %v949, -inf
  %v1013 = vsel %vm957, %v950, -inf
  %v1014 = vmax.f32 %v1012, %v1013
  %v1015 = vrot.slane %v1014, 4
  %v1016 = vmax.f32 %v1014, %v1015
  %v1017 = vrot.slane %v1016, 2
  %v1018 = vmax.f32 %v1016, %v1017
  %v1019 = vrot.slane %v1018, 1
  %v1020 = vmax.f32 %v1018, %v1019
  %v1021 = vsel %vm957, %v951, -inf
  %v1022 = vsel %vm957, %v952, -inf
  %v1023 = vmax.f32 %v1021, %v1022
  %v1024 = vrot.slane %v1023, 4
  %v1025 = vmax.f32 %v1023, %v1024
  %v1026 = vrot.slane %v1025, 2
  %v1027 = vmax.f32 %v1025, %v1026
  %v1028 = vrot.slane %v1027, 1
  %v1029 = vmax.f32 %v1027, %v1028
  %v1030 = vsel %vm957, %v953, -inf
  %v1031 = vsel %vm957, %v954, -inf
  %v1032 = vmax.f32 %v1030, %v1031
  %v1033 = vrot.slane %v1032, 4
  %v1034 = vmax.f32 %v1032, %v1033
  %v1035 = vrot.slane %v1034, 2
  %v1036 = vmax.f32 %v1034, %v1035
  %v1037 = vrot.slane %v1036, 1
  %v1038 = vmax.f32 %v1036, %v1037
  %v1039 = vsel %vm957, %v955, -inf
  %v1040 = vsel %vm957, %v956, -inf
  %v1041 = vmax.f32 %v1039, %v1040
  %v1042 = vrot.slane %v1041, 4
  %v1043 = vmax.f32 %v1041, %v1042
  %v1044 = vrot.slane %v1043, 2
  %v1045 = vmax.f32 %v1043, %v1044
  %v1046 = vrot.slane %v1045, 1
  %v1047 = vmax.f32 %v1045, %v1046
  %v1048 = vsub.f32 %v937, %v966
  %v1049 = vsub.f32 %v938, %v966
  %v1050 = vsub.f32 %v939, %v975
  %v1051 = vsub.f32 %v940, %v975
  %v1052 = vsub.f32 %v941, %v984
  %v1053 = vsub.f32 %v942, %v984
  %v1054 = vsub.f32 %v943, %v993
  %v1055 = vsub.f32 %v944, %v993
  %v1056 = vsub.f32 %v945, %v1002
  %v1057 = vsub.f32 %v946, %v1002
  %v1058 = vsub.f32 %v947, %v1011
  %v1059 = vsub.f32 %v948, %v1011
  %v1060 = vsub.f32 %v949, %v1020
  %v1061 = vsub.f32 %v950, %v1020
  %v1062 = vsub.f32 %v951, %v1029
  %v1063 = vsub.f32 %v952, %v1029
  %v1064 = vsub.f32 %v953, %v1038
  %v1065 = vsub.f32 %v954, %v1038
  %v1066 = vsub.f32 %v955, %v1047
  %v1067 = vsub.f32 %v956, %v1047
  %v1068 = vmul.f32 %v1048, 1.442695
  %v1069 = vpow.pop %v1068
  %v1070 = vmul.f32 %v1049, 1.442695
  %v1071 = vpow.pop %v1070
  %v1072 = vmul.f32 %v1050, 1.442695
  %v1073 = vpow.pop %v1072
  %v1074 = vmul.f32 %v1051, 1.442695
  %v1075 = vpow.pop %v1074
  %v1076 = vmul.f32 %v1052, 1.442695
  %v1077 = vpow.pop %v1076
  %v1078 = vmul.f32 %v1053, 1.442695
  %v1079 = vpow.pop %v1078
  %v1080 = vmul.f32 %v1054, 1.442695
  %v1081 = vpow.pop %v1080
  %v1082 = vmul.f32 %v1055, 1.442695
  %v1083 = vpow.pop %v1082
  %v1084 = vmul.f32 %v1056, 1.442695
  %v1085 = vpow.pop %v1084
  %v1086 = vmul.f32 %v1057, 1.442695
  %v1087 = vpow.pop %v1086
  %v1088 = vmul.f32 %v1058, 1.442695
  %v1089 = vpow.pop %v1088
  %v1090 = vmul.f32 %v1059, 1.442695
  %v1091 = vpow.pop %v1090
  %v1092 = vmul.f32 %v1060, 1.442695
  %v1093 = vpow.pop %v1092
  %v1094 = vmul.f32 %v1061, 1.442695
  %v1095 = vpow.pop %v1094
  %v1096 = vmul.f32 %v1062, 1.442695
  %v1097 = vpow.pop %v1096
  %v1098 = vmul.f32 %v1063, 1.442695
  %v1099 = vpow.pop %v1098
  %v1100 = vmul.f32 %v1064, 1.442695
  %v1101 = vpow.pop %v1100
  %v1102 = vmul.f32 %v1065, 1.442695
  %v1103 = vpow.pop %v1102
  %v1104 = vmul.f32 %v1066, 1.442695
  %v1105 = vpow.pop %v1104
  %v1106 = vmul.f32 %v1067, 1.442695
  %v1107 = vpow.pop %v1106
  %v1108 = vsel %vm957, %v1069, 0.0
  %v1109 = vsel %vm957, %v1071, 0.0
  %v1110 = vadd.f32 %v1108, %v1109
  %v1111 = vrot.slane %v1110, 4
  %v1112 = vadd.f32 %v1110, %v1111
  %v1113 = vrot.slane %v1112, 2
  %v1114 = vadd.f32 %v1112, %v1113
  %v1115 = vrot.slane %v1114, 1
  %v1116 = vadd.f32 %v1114, %v1115
  %v1117 = vsel %vm957, %v1073, 0.0
  %v1118 = vsel %vm957, %v1075, 0.0
  %v1119 = vadd.f32 %v1117, %v1118
  %v1120 = vrot.slane %v1119, 4
  %v1121 = vadd.f32 %v1119, %v1120
  %v1122 = vrot.slane %v1121, 2
  %v1123 = vadd.f32 %v1121, %v1122
  %v1124 = vrot.slane %v1123, 1
  %v1125 = vadd.f32 %v1123, %v1124
  %v1126 = vsel %vm957, %v1077, 0.0
  %v1127 = vsel %vm957, %v1079, 0.0
  %v1128 = vadd.f32 %v1126, %v1127
  %v1129 = vrot.slane %v1128, 4
  %v1130 = vadd.f32 %v1128, %v1129
  %v1131 = vrot.slane %v1130, 2
  %v1132 = vadd.f32 %v1130, %v1131
  %v1133 = vrot.slane %v1132, 1
  %v1134 = vadd.f32 %v1132, %v1133
  %v1135 = vsel %vm957, %v1081, 0.0
  %v1136 = vsel %vm957, %v1083, 0.0
  %v1137 = vadd.f32 %v1135, %v1136
  %v1138 = vrot.slane %v1137, 4
  %v1139 = vadd.f32 %v1137, %v1138
  %v1140 = vrot.slane %v1139, 2
  %v1141 = vadd.f32 %v1139, %v1140
  %v1142 = vrot.slane %v1141, 1
  %v1143 = vadd.f32 %v1141, %v1142
  %v1144 = vsel %vm957, %v1085, 0.0
  %v1145 = vsel %vm957, %v1087, 0.0
  %v1146 = vadd.f32 %v1144, %v1145
  %v1147 = vrot.slane %v1146, 4
  %v1148 = vadd.f32 %v1146, %v1147
  %v1149 = vrot.slane %v1148, 2
  %v1150 = vadd.f32 %v1148, %v1149
  %v1151 = vrot.slane %v1150, 1
  %v1152 = vadd.f32 %v1150, %v1151
  %v1153 = vsel %vm957, %v1089, 0.0
  %v1154 = vsel %vm957, %v1091, 0.0
  %v1155 = vadd.f32 %v1153, %v1154
  %v1156 = vrot.slane %v1155, 4
  %v1157 = vadd.f32 %v1155, %v1156
  %v1158 = vrot.slane %v1157, 2
  %v1159 = vadd.f32 %v1157, %v1158
  %v1160 = vrot.slane %v1159, 1
  %v1161 = vadd.f32 %v1159, %v1160
  %v1162 = vsel %vm957, %v1093, 0.0
  %v1163 = vsel %vm957, %v1095, 0.0
  %v1164 = vadd.f32 %v1162, %v1163
  %v1165 = vrot.slane %v1164, 4
  %v1166 = vadd.f32 %v1164, %v1165
  %v1167 = vrot.slane %v1166, 2
  %v1168 = vadd.f32 %v1166, %v1167
  %v1169 = vrot.slane %v1168, 1
  %v1170 = vadd.f32 %v1168, %v1169
  %v1171 = vsel %vm957, %v1097, 0.0
  %v1172 = vsel %vm957, %v1099, 0.0
  %v1173 = vadd.f32 %v1171, %v1172
  %v1174 = vrot.slane %v1173, 4
  %v1175 = vadd.f32 %v1173, %v1174
  %v1176 = vrot.slane %v1175, 2
  %v1177 = vadd.f32 %v1175, %v1176
  %v1178 = vrot.slane %v1177, 1
  %v1179 = vadd.f32 %v1177, %v1178
  %v1180 = vsel %vm957, %v1101, 0.0
  %v1181 = vsel %vm957, %v1103, 0.0
  %v1182 = vadd.f32 %v1180, %v1181
  %v1183 = vrot.slane %v1182, 4
  %v1184 = vadd.f32 %v1182, %v1183
  %v1185 = vrot.slane %v1184, 2
  %v1186 = vadd.f32 %v1184, %v1185
  %v1187 = vrot.slane %v1186, 1
  %v1188 = vadd.f32 %v1186, %v1187
  %v1189 = vsel %vm957, %v1105, 0.0
  %v1190 = vsel %vm957, %v1107, 0.0
  %v1191 = vadd.f32 %v1189, %v1190
  %v1192 = vrot.slane %v1191, 4
  %v1193 = vadd.f32 %v1191, %v1192
  %v1194 = vrot.slane %v1193, 2
  %v1195 = vadd.f32 %v1193, %v1194
  %v1196 = vrot.slane %v1195, 1
  %v1197 = vadd.f32 %v1195, %v1196
  %v1198 = vrcp.pop %v1116
  %v1199 = vmul.f32 %v1069, %v1198
  %v1200 = vmul.f32 %v1071, %v1198
  %v1201 = vrcp.pop %v1125
  %v1202 = vmul.f32 %v1073, %v1201
  %v1203 = vmul.f32 %v1075, %v1201
  %v1204 = vrcp.pop %v1134
  %v1205 = vmul.f32 %v1077, %v1204
  %v1206 = vmul.f32 %v1079, %v1204
  %v1207 = vrcp.pop %v1143
  %v1208 = vmul.f32 %v1081, %v1207
  %v1209 = vmul.f32 %v1083, %v1207
  %v1210 = vrcp.pop %v1152
  %v1211 = vmul.f32 %v1085, %v1210
  %v1212 = vmul.f32 %v1087, %v1210
  %v1213 = vrcp.pop %v1161
  %v1214 = vmul.f32 %v1089, %v1213
  %v1215 = vmul.f32 %v1091, %v1213
  %v1216 = vrcp.pop %v1170
  %v1217 = vmul.f32 %v1093, %v1216
  %v1218 = vmul.f32 %v1095, %v1216
  %v1219 = vrcp.pop %v1179
  %v1220 = vmul.f32 %v1097, %v1219
  %v1221 = vmul.f32 %v1099, %v1219
  %v1222 = vrcp.pop %v1188
  %v1223 = vmul.f32 %v1101, %v1222
  %v1224 = vmul.f32 %v1103, %v1222
  %v1225 = vrcp.pop %v1197
  %v1226 = vmul.f32 %v1105, %v1225
  %v1227 = vmul.f32 %v1107, %v1225
  %v1229 = vsel %vm957, %v1199, 0
  %v1232 = vsel %vm957, %v1200, 0
  %v1235 = vsel %vm957, %v1202, 0
  %v1238 = vsel %vm957, %v1203, 0
  %v1241 = vsel %vm957, %v1205, 0
  %v1244 = vsel %vm957, %v1206, 0
  %v1247 = vsel %vm957, %v1208, 0
  %v1250 = vsel %vm957, %v1209, 0
  %v1253 = vsel %vm957, %v1211, 0
  %v1256 = vsel %vm957, %v1212, 0
  %v1259 = vsel %vm957, %v1214, 0
  %v1262 = vsel %vm957, %v1215, 0
  %v1265 = vsel %vm957, %v1217, 0
  %v1268 = vsel %vm957, %v1218, 0
  %v1271 = vsel %vm957, %v1220, 0
  %v1274 = vsel %vm957, %v1221, 0
  %v1277 = vsel %vm957, %v1223, 0
  %v1280 = vsel %vm957, %v1224, 0
  %v1283 = vsel %vm957, %v1226, 0
  %v1286 = vsel %vm957, %v1227, 0
  %vm1288 = vcmask 1043456
  %v1290 = vsel %vm1288, %v548, 0
  %1292 = vmatprep.subr.mxu0 0.0
  %1293 = vmatpush1.msra.mxu0 %v1290
  %1294 = vmatprep.subr.mxu0 0.0
  %1295 = vmatpush1.msra.mxu0 0.0
  %1296 = vmatprep.subr.mxu0 0.0
  %1297 = vmatpush1.msra.mxu0 0.0
  %1298 = vmatprep.subr.mxu0 0.0
  %1299 = vmatpush1.msra.mxu0 0.0
  %1300 = vmatprep.subr.mxu0 0.0
  %1301 = vmatpush1.msra.mxu0 0.0
  %1302 = vmatprep.subr.mxu0 0.0
  %1303 = vmatpush1.msra.mxu0 0.0
  %1304 = vmatprep.subr.mxu0 0.0
  %1305 = vmatpush1.msra.mxu0 0.0
  %1306 = vmatprep.subr.mxu0 0.0
  %1307 = vmatpush1.msra.mxu0 0.0
  %1308 = vmatprep.subr.mxu0 0.0
  %1309 = vmatpush1.msra.mxu0 0.0
  %1310 = vmatprep.subr.mxu0 0.0
  %1311 = vmatpush1.msra.mxu0 0.0
  %1312 = vmatprep.subr.mxu0 0.0
  %1313 = vmatpush1.msra.mxu0 0.0
  %1314 = vmatprep.subr.mxu0 0.0
  %1315 = vmatpush1.msra.mxu0 0.0
  %1316 = vmatprep.subr.mxu0 0.0
  %1317 = vmatpush1.msra.mxu0 0.0
  %1318 = vmatprep.subr.mxu0 0.0
  %1319 = vmatpush1.msra.mxu0 0.0
  %1320 = vmatprep.subr.mxu0 0.0
  %1321 = vmatpush1.msra.mxu0 0.0
  %1322 = vmatprep.subr.mxu0 0.0
  %1323 = vmatpush1.msra.mxu0 0.0
  %1324 = vmatprep.subr.mxu0 0.0
  %1325 = vmatpush1.msra.mxu0 0.0
  %1326 = vmatprep.subr.mxu0 0.0
  %1327 = vmatpush1.msra.mxu0 0.0
  %1328 = vmatprep.subr.mxu0 0.0
  %1329 = vmatpush1.msra.mxu0 0.0
  %1330 = vmatprep.subr.mxu0 0.0
  %1331 = vmatpush1.msra.mxu0 0.0
  %1332 = vmatprep.subr.mxu0 0.0
  %1333 = vmatpush1.msra.mxu0 0.0
  %1334 = vmatprep.subr.mxu0 0.0
  %1335 = vmatpush1.msra.mxu0 0.0
  %1336 = vmatprep.subr.mxu0 0.0
  %1337 = vmatpush1.msra.mxu0 0.0
  %1338 = vmatprep.subr.mxu0 0.0
  %1339 = vmatpush1.msra.mxu0 0.0
  %1340 = vmatprep.subr.mxu0 0.0
  %1341 = vmatpush1.msra.mxu0 0.0
  %1342 = vmatprep.subr.mxu0 0.0
  %1343 = vmatpush1.msra.mxu0 0.0
  %1344 = vmatprep.subr.mxu0 0.0
  %1345 = vmatpush1.msra.mxu0 0.0
  %1346 = vmatprep.subr.mxu0 0.0
  %1347 = vmatpush1.msra.mxu0 0.0
  %1348 = vmatprep.subr.mxu0 0.0
  %1349 = vmatpush1.msra.mxu0 0.0
  %1350 = vmatprep.subr.mxu0 0.0
  %1351 = vmatpush1.msra.mxu0 0.0
  %1352 = vmatprep.subr.mxu0 0.0
  %1353 = vmatpush1.msra.mxu0 0.0
  %1354 = vmatprep.subr.mxu0 0.0
  %1355 = vmatpush1.msra.mxu0 0.0
  %1356 = vmatprep.mubr.f32.mxu0 0.0
  %1357 = vmatmul.mubr.f32.gmra.mrb[0].mxu0 %v1229
  %v1358 = vpop.f32.mrb[0].mxu0
  %v1359 = vadd.f32 0.0, %v1358
  %v1360 = vpop.f32.mrb[0].mxu0
  %1361 = vmatprep.mubr.f32.mxu0 0.0
  %1362 = vmatmul.mubr.f32.gmra.mrb[0].mxu0 %v1232
  %v1363 = vpop.f32.mrb[0].mxu0
  %v1364 = vadd.f32 0.0, %v1363
  %v1365 = vpop.f32.mrb[0].mxu0
  %1366 = vmatprep.mubr.f32.mxu0 0.0
  %1367 = vmatmul.mubr.f32.gmra.mrb[0].mxu0 %v1235
  %v1368 = vpop.f32.mrb[0].mxu0
  %v1369 = vadd.f32 0.0, %v1368
  %v1370 = vpop.f32.mrb[0].mxu0
  %1371 = vmatprep.mubr.f32.mxu0 0.0
  %1372 = vmatmul.mubr.f32.gmra.mrb[0].mxu0 %v1238
  %v1373 = vpop.f32.mrb[0].mxu0
  %v1374 = vadd.f32 0.0, %v1373
  %v1375 = vpop.f32.mrb[0].mxu0
  %1376 = vmatprep.mubr.f32.mxu0 0.0
  %1377 = vmatmul.mubr.f32.gmra.mrb[0].mxu0 %v1241
  %v1378 = vpop.f32.mrb[0].mxu0
  %v1379 = vadd.f32 0.0, %v1378
  %v1380 = vpop.f32.mrb[0].mxu0
  %1381 = vmatprep.mubr.f32.mxu0 0.0
  %1382 = vmatmul.mubr.f32.gmra.mrb[0].mxu0 %v1244
  %v1383 = vpop.f32.mrb[0].mxu0
  %v1384 = vadd.f32 0.0, %v1383
  %v1385 = vpop.f32.mrb[0].mxu0
  %1386 = vmatprep.mubr.f32.mxu0 0.0
  %1387 = vmatmul.mubr.f32.gmra.mrb[0].mxu0 %v1247
  %v1388 = vpop.f32.mrb[0].mxu0
  %v1389 = vadd.f32 0.0, %v1388
  %v1390 = vpop.f32.mrb[0].mxu0
  %1391 = vmatprep.mubr.f32.mxu0 0.0
  %1392 = vmatmul.mubr.f32.gmra.mrb[0].mxu0 %v1250
  %v1393 = vpop.f32.mrb[0].mxu0
  %v1394 = vadd.f32 0.0, %v1393
  %v1395 = vpop.f32.mrb[0].mxu0
  %1396 = vmatprep.mubr.f32.mxu0 0.0
  %1397 = vmatmul.mubr.f32.gmra.mrb[0].mxu0 %v1253
  %v1398 = vpop.f32.mrb[0].mxu0
  %v1399 = vadd.f32 0.0, %v1398
  %v1400 = vpop.f32.mrb[0].mxu0
  %1401 = vmatprep.mubr.f32.mxu0 0.0
  %1402 = vmatmul.mubr.f32.gmra.mrb[0].mxu0 %v1256
  %v1403 = vpop.f32.mrb[0].mxu0
  %v1404 = vadd.f32 0.0, %v1403
  %v1405 = vpop.f32.mrb[0].mxu0
  %1406 = vmatprep.mubr.f32.mxu0 0.0
  %1407 = vmatmul.mubr.f32.gmra.mrb[0].mxu0 %v1259
  %v1408 = vpop.f32.mrb[0].mxu0
  %v1409 = vadd.f32 0.0, %v1408
  %v1410 = vpop.f32.mrb[0].mxu0
  %1411 = vmatprep.mubr.f32.mxu0 0.0
  %1412 = vmatmul.mubr.f32.gmra.mrb[0].mxu0 %v1262
  %v1413 = vpop.f32.mrb[0].mxu0
  %v1414 = vadd.f32 0.0, %v1413
  %v1415 = vpop.f32.mrb[0].mxu0
  %1416 = vmatprep.mubr.f32.mxu0 0.0
  %1417 = vmatmul.mubr.f32.gmra.mrb[0].mxu0 %v1265
  %v1418 = vpop.f32.mrb[0].mxu0
  %v1419 = vadd.f32 0.0, %v1418
  %v1420 = vpop.f32.mrb[0].mxu0
  %1421 = vmatprep.mubr.f32.mxu0 0.0
  %1422 = vmatmul.mubr.f32.gmra.mrb[0].mxu0 %v1268
  %v1423 = vpop.f32.mrb[0].mxu0
  %v1424 = vadd.f32 0.0, %v1423
  %v1425 = vpop.f32.mrb[0].mxu0
  %1426 = vmatprep.mubr.f32.mxu0 0.0
  %1427 = vmatmul.mubr.f32.gmra.mrb[0].mxu0 %v1271
  %v1428 = vpop.f32.mrb[0].mxu0
  %v1429 = vadd.f32 0.0, %v1428
  %v1430 = vpop.f32.mrb[0].mxu0
  %1431 = vmatprep.mubr.f32.mxu0 0.0
  %1432 = vmatmul.mubr.f32.gmra.mrb[0].mxu0 %v1274
  %v1433 = vpop.f32.mrb[0].mxu0
  %v1434 = vadd.f32 0.0, %v1433
  %v1435 = vpop.f32.mrb[0].mxu0
  %1436 = vmatprep.mubr.f32.mxu0 0.0
  %1437 = vmatmul.mubr.f32.gmra.mrb[0].mxu0 %v1277
  %v1438 = vpop.f32.mrb[0].mxu0
  %v1439 = vadd.f32 0.0, %v1438
  %v1440 = vpop.f32.mrb[0].mxu0
  %1441 = vmatprep.mubr.f32.mxu0 0.0
  %1442 = vmatmul.mubr.f32.gmra.mrb[0].mxu0 %v1280
  %v1443 = vpop.f32.mrb[0].mxu0
  %v1444 = vadd.f32 0.0, %v1443
  %v1445 = vpop.f32.mrb[0].mxu0
  %1446 = vmatprep.mubr.f32.mxu0 0.0
  %1447 = vmatmul.mubr.f32.gmra.mrb[0].mxu0 %v1283
  %v1448 = vpop.f32.mrb[0].mxu0
  %v1449 = vadd.f32 0.0, %v1448
  %v1450 = vpop.f32.mrb[0].mxu0
  %1451 = vmatprep.mubr.f32.mxu0 0.0
  %1452 = vmatmul.mubr.f32.gmra.mrb[0].mxu0 %v1286
  %v1453 = vpop.f32.mrb[0].mxu0
  %v1454 = vadd.f32 0.0, %v1453
  %v1455 = vpop.f32.mrb[0].mxu0
  %1456 = vdwg.mxu0
  %1477 = vrot.lane.b32.xlu0 %v190, 96
  %v1478 = vpop.permute.xlu0 %1477
  %1479 = vrot.lane.b32.xlu0 %v195, 96
  %v1480 = vpop.permute.xlu0 %1479
  %1481 = vrot.lane.b32.xlu0 %v200, 96
  %v1482 = vpop.permute.xlu0 %1481
  %1483 = vrot.lane.b32.xlu0 %v205, 96
  %v1484 = vpop.permute.xlu0 %1483
  %1485 = vrot.lane.b32.xlu0 %v210, 96
  %v1486 = vpop.permute.xlu0 %1485
  %1487 = vrot.lane.b32.xlu0 %v215, 96
  %v1488 = vpop.permute.xlu0 %1487
  %1489 = vrot.lane.b32.xlu0 %v220, 96
  %v1490 = vpop.permute.xlu0 %1489
  %1491 = vrot.lane.b32.xlu0 %v225, 96
  %v1492 = vpop.permute.xlu0 %1491
  %1493 = vrot.lane.b32.xlu0 %v230, 96
  %v1494 = vpop.permute.xlu0 %1493
  %1495 = vrot.lane.b32.xlu0 %v235, 96
  %v1496 = vpop.permute.xlu0 %1495
  %1497 = vrot.lane.b32.xlu0 %v240, 96
  %v1498 = vpop.permute.xlu0 %1497
  %1499 = vrot.lane.b32.xlu0 %v245, 96
  %v1500 = vpop.permute.xlu0 %1499
  %1501 = vrot.lane.b32.xlu0 %v250, 96
  %v1502 = vpop.permute.xlu0 %1501
  %1503 = vrot.lane.b32.xlu0 %v255, 96
  %v1504 = vpop.permute.xlu0 %1503
  %1505 = vrot.lane.b32.xlu0 %v260, 96
  %v1506 = vpop.permute.xlu0 %1505
  %1507 = vrot.lane.b32.xlu0 %v265, 96
  %v1508 = vpop.permute.xlu0 %1507
  %1509 = vrot.lane.b32.xlu0 %v270, 96
  %v1510 = vpop.permute.xlu0 %1509
  %1511 = vrot.lane.b32.xlu0 %v275, 96
  %v1512 = vpop.permute.xlu0 %1511
  %1513 = vrot.lane.b32.xlu0 %v280, 96
  %v1514 = vpop.permute.xlu0 %1513
  %1515 = vrot.lane.b32.xlu0 %v285, 96
  %v1516 = vpop.permute.xlu0 %1515
  %v1537 = vmul.f32 %v1359, %v1478
  %v1538 = vmul.f32 %v1364, %v1480
  %v1539 = vmul.f32 %v1369, %v1482
  %v1540 = vmul.f32 %v1374, %v1484
  %v1541 = vmul.f32 %v1379, %v1486
  %v1542 = vmul.f32 %v1384, %v1488
  %v1543 = vmul.f32 %v1389, %v1490
  %v1544 = vmul.f32 %v1394, %v1492
  %v1545 = vmul.f32 %v1399, %v1494
  %v1546 = vmul.f32 %v1404, %v1496
  %v1547 = vmul.f32 %v1409, %v1498
  %v1548 = vmul.f32 %v1414, %v1500
  %v1549 = vmul.f32 %v1419, %v1502
  %v1550 = vmul.f32 %v1424, %v1504
  %v1551 = vmul.f32 %v1429, %v1506
  %v1552 = vmul.f32 %v1434, %v1508
  %v1553 = vmul.f32 %v1439, %v1510
  %v1554 = vmul.f32 %v1444, %v1512
  %v1555 = vmul.f32 %v1449, %v1514
  %v1556 = vmul.f32 %v1454, %v1516
  %v1557 = vsel %vm62, %v1537, 0.0
  %v1558 = vsel %vm62, %v1538, 0.0
  %v1559 = vadd.f32 %v1557, %v1558
  %v1560 = vrot.slane %v1559, 4
  %v1561 = vadd.f32 %v1559, %v1560
  %v1562 = vrot.slane %v1561, 2
  %v1563 = vadd.f32 %v1561, %v1562
  %v1564 = vrot.slane %v1563, 1
  %v1565 = vadd.f32 %v1563, %v1564
  %v1566 = vsel %vm62, %v1539, 0.0
  %v1567 = vsel %vm62, %v1540, 0.0
  %v1568 = vadd.f32 %v1566, %v1567
  %v1569 = vrot.slane %v1568, 4
  %v1570 = vadd.f32 %v1568, %v1569
  %v1571 = vrot.slane %v1570, 2
  %v1572 = vadd.f32 %v1570, %v1571
  %v1573 = vrot.slane %v1572, 1
  %v1574 = vadd.f32 %v1572, %v1573
  %v1575 = vsel %vm62, %v1541, 0.0
  %v1576 = vsel %vm62, %v1542, 0.0
  %v1577 = vadd.f32 %v1575, %v1576
  %v1578 = vrot.slane %v1577, 4
  %v1579 = vadd.f32 %v1577, %v1578
  %v1580 = vrot.slane %v1579, 2
  %v1581 = vadd.f32 %v1579, %v1580
  %v1582 = vrot.slane %v1581, 1
  %v1583 = vadd.f32 %v1581, %v1582
  %v1584 = vsel %vm62, %v1543, 0.0
  %v1585 = vsel %vm62, %v1544, 0.0
  %v1586 = vadd.f32 %v1584, %v1585
  %v1587 = vrot.slane %v1586, 4
  %v1588 = vadd.f32 %v1586, %v1587
  %v1589 = vrot.slane %v1588, 2
  %v1590 = vadd.f32 %v1588, %v1589
  %v1591 = vrot.slane %v1590, 1
  %v1592 = vadd.f32 %v1590, %v1591
  %v1593 = vsel %vm62, %v1545, 0.0
  %v1594 = vsel %vm62, %v1546, 0.0
  %v1595 = vadd.f32 %v1593, %v1594
  %v1596 = vrot.slane %v1595, 4
  %v1597 = vadd.f32 %v1595, %v1596
  %v1598 = vrot.slane %v1597, 2
  %v1599 = vadd.f32 %v1597, %v1598
  %v1600 = vrot.slane %v1599, 1
  %v1601 = vadd.f32 %v1599, %v1600
  %v1602 = vsel %vm62, %v1547, 0.0
  %v1603 = vsel %vm62, %v1548, 0.0
  %v1604 = vadd.f32 %v1602, %v1603
  %v1605 = vrot.slane %v1604, 4
  %v1606 = vadd.f32 %v1604, %v1605
  %v1607 = vrot.slane %v1606, 2
  %v1608 = vadd.f32 %v1606, %v1607
  %v1609 = vrot.slane %v1608, 1
  %v1610 = vadd.f32 %v1608, %v1609
  %v1611 = vsel %vm62, %v1549, 0.0
  %v1612 = vsel %vm62, %v1550, 0.0
  %v1613 = vadd.f32 %v1611, %v1612
  %v1614 = vrot.slane %v1613, 4
  %v1615 = vadd.f32 %v1613, %v1614
  %v1616 = vrot.slane %v1615, 2
  %v1617 = vadd.f32 %v1615, %v1616
  %v1618 = vrot.slane %v1617, 1
  %v1619 = vadd.f32 %v1617, %v1618
  %v1620 = vsel %vm62, %v1551, 0.0
  %v1621 = vsel %vm62, %v1552, 0.0
  %v1622 = vadd.f32 %v1620, %v1621
  %v1623 = vrot.slane %v1622, 4
  %v1624 = vadd.f32 %v1622, %v1623
  %v1625 = vrot.slane %v1624, 2
  %v1626 = vadd.f32 %v1624, %v1625
  %v1627 = vrot.slane %v1626, 1
  %v1628 = vadd.f32 %v1626, %v1627
  %v1629 = vsel %vm62, %v1553, 0.0
  %v1630 = vsel %vm62, %v1554, 0.0
  %v1631 = vadd.f32 %v1629, %v1630
  %v1632 = vrot.slane %v1631, 4
  %v1633 = vadd.f32 %v1631, %v1632
  %v1634 = vrot.slane %v1633, 2
  %v1635 = vadd.f32 %v1633, %v1634
  %v1636 = vrot.slane %v1635, 1
  %v1637 = vadd.f32 %v1635, %v1636
  %v1638 = vsel %vm62, %v1555, 0.0
  %v1639 = vsel %vm62, %v1556, 0.0
  %v1640 = vadd.f32 %v1638, %v1639
  %v1641 = vrot.slane %v1640, 4
  %v1642 = vadd.f32 %v1640, %v1641
  %v1643 = vrot.slane %v1642, 2
  %v1644 = vadd.f32 %v1642, %v1643
  %v1645 = vrot.slane %v1644, 1
  %v1646 = vadd.f32 %v1644, %v1645
  %v1647 = vld [vmem:[%s3] sm:$0xff]
  %v1648 = vld [vmem:[%s3 + $0x10] sm:$0xff]
  %v1649 = vld [vmem:[%s3 + $0x20] sm:$0xff]
  %v1650 = vld [vmem:[%s3 + $0x30] sm:$0xff]
  %v1651 = vld [vmem:[%s3 + $0x40] ss:$0 sm:$0xff]
  %vm1662 = vcmask 1041409
  %v1663 = vsel %vm1662, %v1574, %v1565
  %vm1664 = vcmask 1042434
  %v1665 = vsel %vm1664, %v1583, %v1663
  %vm1666 = vcmask 1043459
  %v1667 = vsel %vm1666, %v1592, %v1665
  %vm1668 = vcmask 1044484
  %v1669 = vsel %vm1668, %v1601, %v1667
  %vm1670 = vcmask 1045509
  %v1671 = vsel %vm1670, %v1610, %v1669
  %vm1672 = vcmask 1046534
  %v1673 = vsel %vm1672, %v1619, %v1671
  %vm1674 = vcmask 1047559
  %v1675 = vsel %vm1674, %v1628, %v1673
  %v1676 = vsel %vm1662, %v1646, %v1637
  %1681 = vrot.lane.b32.xlu0 %v1647, 32
  %v1682 = vpop.permute.xlu0 %1681
  %1683 = vrot.lane.b32.xlu0 %v1648, 32
  %v1684 = vpop.permute.xlu0 %1683
  %1685 = vrot.lane.b32.xlu0 %v1649, 32
  %v1686 = vpop.permute.xlu0 %1685
  %1687 = vrot.lane.b32.xlu0 %v1650, 32
  %v1688 = vpop.permute.xlu0 %1687
  %1694 = vrot.lane.b32.xlu0 %v1651, 32
  %v1695 = vpop.permute.xlu0 %1694
  %v1697 = vsel %vm62, %v1675, 0
  %v1699 = vsel %vm62, %v1676, 0
  %1701 = vmatprep.subr.mxu0 0.0
  %1702 = vmatpush1.msra.mxu0 %v1682
  %1703 = vmatprep.subr.mxu0 0.0
  %1704 = vmatpush1.msra.mxu0 %v1684
  %1705 = vmatprep.subr.mxu0 0.0
  %1706 = vmatpush1.msra.mxu0 %v1686
  %1707 = vmatprep.subr.mxu0 0.0
  %1708 = vmatpush1.msra.mxu0 %v1688
  %1709 = vmatprep.subr.mxu0 0.0
  %1710 = vmatpush1.msra.mxu0 0.0
  %1711 = vmatprep.subr.mxu0 0.0
  %1712 = vmatpush1.msra.mxu0 0.0
  %1713 = vmatprep.subr.mxu0 0.0
  %1714 = vmatpush1.msra.mxu0 0.0
  %1715 = vmatprep.subr.mxu0 0.0
  %1716 = vmatpush1.msra.mxu0 0.0
  %1717 = vmatprep.subr.mxu0 0.0
  %1718 = vmatpush1.msra.mxu0 0.0
  %1719 = vmatprep.subr.mxu0 0.0
  %1720 = vmatpush1.msra.mxu0 0.0
  %1721 = vmatprep.subr.mxu0 0.0
  %1722 = vmatpush1.msra.mxu0 0.0
  %1723 = vmatprep.subr.mxu0 0.0
  %1724 = vmatpush1.msra.mxu0 0.0
  %1725 = vmatprep.subr.mxu0 0.0
  %1726 = vmatpush1.msra.mxu0 0.0
  %1727 = vmatprep.subr.mxu0 0.0
  %1728 = vmatpush1.msra.mxu0 0.0
  %1729 = vmatprep.subr.mxu0 0.0
  %1730 = vmatpush1.msra.mxu0 0.0
  %1731 = vmatprep.subr.mxu0 0.0
  %1732 = vmatpush1.msra.mxu0 0.0
  %1733 = vmatprep.subr.mxu0 0.0
  %1734 = vmatpush1.msra.mxu0 0.0
  %1735 = vmatprep.subr.mxu0 0.0
  %1736 = vmatpush1.msra.mxu0 0.0
  %1737 = vmatprep.subr.mxu0 0.0
  %1738 = vmatpush1.msra.mxu0 0.0
  %1739 = vmatprep.subr.mxu0 0.0
  %1740 = vmatpush1.msra.mxu0 0.0
  %1741 = vmatprep.subr.mxu0 0.0
  %1742 = vmatpush1.msra.mxu0 0.0
  %1743 = vmatprep.subr.mxu0 0.0
  %1744 = vmatpush1.msra.mxu0 0.0
  %1745 = vmatprep.subr.mxu0 0.0
  %1746 = vmatpush1.msra.mxu0 0.0
  %1747 = vmatprep.subr.mxu0 0.0
  %1748 = vmatpush1.msra.mxu0 0.0
  %1749 = vmatprep.subr.mxu0 0.0
  %1750 = vmatpush1.msra.mxu0 0.0
  %1751 = vmatprep.subr.mxu0 0.0
  %1752 = vmatpush1.msra.mxu0 0.0
  %1753 = vmatprep.subr.mxu0 0.0
  %1754 = vmatpush1.msra.mxu0 0.0
  %1755 = vmatprep.subr.mxu0 0.0
  %1756 = vmatpush1.msra.mxu0 0.0
  %1757 = vmatprep.subr.mxu0 0.0
  %1758 = vmatpush1.msra.mxu0 0.0
  %1759 = vmatprep.subr.mxu0 0.0
  %1760 = vmatpush1.msra.mxu0 0.0
  %1761 = vmatprep.subr.mxu0 0.0
  %1762 = vmatpush1.msra.mxu0 0.0
  %1763 = vmatprep.subr.mxu0 0.0
  %1764 = vmatpush1.msra.mxu0 0.0
  %1765 = vmatprep.mubr.f32.mxu0 0.0
  %1766 = vmatmul.mubr.f32.gmra.mrb[0].mxu0 %v1697
  %v1767 = vpop.f32.mrb[0].mxu0
  %v1768 = vadd.f32 %v1695, %v1767
  %v1769 = vpop.f32.mrb[0].mxu0
  %1770 = vmatprep.mubr.f32.mxu0 0.0
  %1771 = vmatmul.mubr.f32.gmra.mrb[0].mxu0 %v1699
  %v1772 = vpop.f32.mrb[0].mxu0
  %v1773 = vadd.f32 %v1695, %v1772
  %v1774 = vpop.f32.mrb[0].mxu0
  %1775 = vdwg.mxu0
  %v1776 = vld [vmem:[%s3 + $0x8] sm:$0xff]
  %v1777 = vld [vmem:[%s3 + $0x18] sm:$0xff]
  %v1778 = vld [vmem:[%s3 + $0x28] sm:$0xff]
  %v1779 = vld [vmem:[%s3 + $0x38] sm:$0xff]
  %v1780 = vld [vmem:[%s3 + $0x48] ss:$0 sm:$0xff]
  %v1782 = vsel %vm62, %v1768, 0
  %v1785 = vsel %vm62, %v1773, 0
  %1787 = vmatprep.subr.mxu0 0.0
  %1788 = vmatpush1.msra.mxu0 %v1776
  %1789 = vmatprep.subr.mxu0 0.0
  %1790 = vmatpush1.msra.mxu0 %v1777
  %1791 = vmatprep.subr.mxu0 0.0
  %1792 = vmatpush1.msra.mxu0 %v1778
  %1793 = vmatprep.subr.mxu0 0.0
  %1794 = vmatpush1.msra.mxu0 %v1779
  %1795 = vmatprep.subr.mxu0 0.0
  %1796 = vmatpush1.msra.mxu0 0.0
  %1797 = vmatprep.subr.mxu0 0.0
  %1798 = vmatpush1.msra.mxu0 0.0
  %1799 = vmatprep.subr.mxu0 0.0
  %1800 = vmatpush1.msra.mxu0 0.0
  %1801 = vmatprep.subr.mxu0 0.0
  %1802 = vmatpush1.msra.mxu0 0.0
  %1803 = vmatprep.subr.mxu0 0.0
  %1804 = vmatpush1.msra.mxu0 0.0
  %1805 = vmatprep.subr.mxu0 0.0
  %1806 = vmatpush1.msra.mxu0 0.0
  %1807 = vmatprep.subr.mxu0 0.0
  %1808 = vmatpush1.msra.mxu0 0.0
  %1809 = vmatprep.subr.mxu0 0.0
  %1810 = vmatpush1.msra.mxu0 0.0
  %1811 = vmatprep.subr.mxu0 0.0
  %1812 = vmatpush1.msra.mxu0 0.0
  %1813 = vmatprep.subr.mxu0 0.0
  %1814 = vmatpush1.msra.mxu0 0.0
  %1815 = vmatprep.subr.mxu0 0.0
  %1816 = vmatpush1.msra.mxu0 0.0
  %1817 = vmatprep.subr.mxu0 0.0
  %1818 = vmatpush1.msra.mxu0 0.0
  %1819 = vmatprep.subr.mxu0 0.0
  %1820 = vmatpush1.msra.mxu0 0.0
  %1821 = vmatprep.subr.mxu0 0.0
  %1822 = vmatpush1.msra.mxu0 0.0
  %1823 = vmatprep.subr.mxu0 0.0
  %1824 = vmatpush1.msra.mxu0 0.0
  %1825 = vmatprep.subr.mxu0 0.0
  %1826 = vmatpush1.msra.mxu0 0.0
  %1827 = vmatprep.subr.mxu0 0.0
  %1828 = vmatpush1.msra.mxu0 0.0
  %1829 = vmatprep.subr.mxu0 0.0
  %1830 = vmatpush1.msra.mxu0 0.0
  %1831 = vmatprep.subr.mxu0 0.0
  %1832 = vmatpush1.msra.mxu0 0.0
  %1833 = vmatprep.subr.mxu0 0.0
  %1834 = vmatpush1.msra.mxu0 0.0
  %1835 = vmatprep.subr.mxu0 0.0
  %1836 = vmatpush1.msra.mxu0 0.0
  %1837 = vmatprep.subr.mxu0 0.0
  %1838 = vmatpush1.msra.mxu0 0.0
  %1839 = vmatprep.subr.mxu0 0.0
  %1840 = vmatpush1.msra.mxu0 0.0
  %1841 = vmatprep.subr.mxu0 0.0
  %1842 = vmatpush1.msra.mxu0 0.0
  %1843 = vmatprep.subr.mxu0 0.0
  %1844 = vmatpush1.msra.mxu0 0.0
  %1845 = vmatprep.subr.mxu0 0.0
  %1846 = vmatpush1.msra.mxu0 0.0
  %1847 = vmatprep.subr.mxu0 0.0
  %1848 = vmatpush1.msra.mxu0 0.0
  %1849 = vmatprep.subr.mxu0 0.0
  %1850 = vmatpush1.msra.mxu0 0.0
  %1851 = vmatprep.mubr.f32.mxu0 0.0
  %1852 = vmatmul.mubr.f32.gmra.mrb[0].mxu0 %v1782
  %v1853 = vpop.f32.mrb[0].mxu0
  %v1854 = vadd.f32 %v1780, %v1853
  %v1855 = vpop.f32.mrb[0].mxu0
  %1856 = vmatprep.mubr.f32.mxu0 0.0
  %1857 = vmatmul.mubr.f32.gmra.mrb[0].mxu0 %v1785
  %v1858 = vpop.f32.mrb[0].mxu0
  %v1859 = vadd.f32 %v1780, %v1858
  %v1860 = vpop.f32.mrb[0].mxu0
  %1861 = vdwg.mxu0
  %v1862 = vtanh.pop %v1854
  %v1863 = vtanh.pop %v1859
  %1868 = vrot.lane.b32.xlu0 %v1776, 96
  %v1869 = vpop.permute.xlu0 %1868
  %1870 = vrot.lane.b32.xlu0 %v1777, 96
  %v1871 = vpop.permute.xlu0 %1870
  %1872 = vrot.lane.b32.xlu0 %v1778, 96
  %v1873 = vpop.permute.xlu0 %1872
  %1874 = vrot.lane.b32.xlu0 %v1779, 96
  %v1875 = vpop.permute.xlu0 %1874
  %1881 = vrot.lane.b32.xlu0 %v1780, 96
  %v1882 = vpop.permute.xlu0 %1881
  %v1885 = vsel %vm62, %v1862, 0
  %v1888 = vsel %vm62, %v1863, 0
  %1890 = vmatprep.subr.mxu0 0.0
  %1891 = vmatpush1.msra.mxu0 %v1869
  %1892 = vmatprep.subr.mxu0 0.0
  %1893 = vmatpush1.msra.mxu0 %v1871
  %1894 = vmatprep.subr.mxu0 0.0
  %1895 = vmatpush1.msra.mxu0 %v1873
  %1896 = vmatprep.subr.mxu0 0.0
  %1897 = vmatpush1.msra.mxu0 %v1875
  %1898 = vmatprep.subr.mxu0 0.0
  %1899 = vmatpush1.msra.mxu0 0.0
  %1900 = vmatprep.subr.mxu0 0.0
  %1901 = vmatpush1.msra.mxu0 0.0
  %1902 = vmatprep.subr.mxu0 0.0
  %1903 = vmatpush1.msra.mxu0 0.0
  %1904 = vmatprep.subr.mxu0 0.0
  %1905 = vmatpush1.msra.mxu0 0.0
  %1906 = vmatprep.subr.mxu0 0.0
  %1907 = vmatpush1.msra.mxu0 0.0
  %1908 = vmatprep.subr.mxu0 0.0
  %1909 = vmatpush1.msra.mxu0 0.0
  %1910 = vmatprep.subr.mxu0 0.0
  %1911 = vmatpush1.msra.mxu0 0.0
  %1912 = vmatprep.subr.mxu0 0.0
  %1913 = vmatpush1.msra.mxu0 0.0
  %1914 = vmatprep.subr.mxu0 0.0
  %1915 = vmatpush1.msra.mxu0 0.0
  %1916 = vmatprep.subr.mxu0 0.0
  %1917 = vmatpush1.msra.mxu0 0.0
  %1918 = vmatprep.subr.mxu0 0.0
  %1919 = vmatpush1.msra.mxu0 0.0
  %1920 = vmatprep.subr.mxu0 0.0
  %1921 = vmatpush1.msra.mxu0 0.0
  %1922 = vmatprep.subr.mxu0 0.0
  %1923 = vmatpush1.msra.mxu0 0.0
  %1924 = vmatprep.subr.mxu0 0.0
  %1925 = vmatpush1.msra.mxu0 0.0
  %1926 = vmatprep.subr.mxu0 0.0
  %1927 = vmatpush1.msra.mxu0 0.0
  %1928 = vmatprep.subr.mxu0 0.0
  %1929 = vmatpush1.msra.mxu0 0.0
  %1930 = vmatprep.subr.mxu0 0.0
  %1931 = vmatpush1.msra.mxu0 0.0
  %1932 = vmatprep.subr.mxu0 0.0
  %1933 = vmatpush1.msra.mxu0 0.0
  %1934 = vmatprep.subr.mxu0 0.0
  %1935 = vmatpush1.msra.mxu0 0.0
  %1936 = vmatprep.subr.mxu0 0.0
  %1937 = vmatpush1.msra.mxu0 0.0
  %1938 = vmatprep.subr.mxu0 0.0
  %1939 = vmatpush1.msra.mxu0 0.0
  %1940 = vmatprep.subr.mxu0 0.0
  %1941 = vmatpush1.msra.mxu0 0.0
  %1942 = vmatprep.subr.mxu0 0.0
  %1943 = vmatpush1.msra.mxu0 0.0
  %1944 = vmatprep.subr.mxu0 0.0
  %1945 = vmatpush1.msra.mxu0 0.0
  %1946 = vmatprep.subr.mxu0 0.0
  %1947 = vmatpush1.msra.mxu0 0.0
  %1948 = vmatprep.subr.mxu0 0.0
  %1949 = vmatpush1.msra.mxu0 0.0
  %1950 = vmatprep.subr.mxu0 0.0
  %1951 = vmatpush1.msra.mxu0 0.0
  %1952 = vmatprep.subr.mxu0 0.0
  %1953 = vmatpush1.msra.mxu0 0.0
  %1954 = vmatprep.mubr.f32.mxu0 0.0
  %1955 = vmatmul.mubr.f32.gmra.mrb[0].mxu0 %v1885
  %v1956 = vpop.f32.mrb[0].mxu0
  %v1957 = vadd.f32 %v1882, %v1956
  %v1958 = vpop.f32.mrb[0].mxu0
  %1959 = vmatprep.mubr.f32.mxu0 0.0
  %1960 = vmatmul.mubr.f32.gmra.mrb[0].mxu0 %v1888
  %v1961 = vpop.f32.mrb[0].mxu0
  %v1962 = vadd.f32 %v1882, %v1961
  %v1963 = vpop.f32.mrb[0].mxu0
  %1964 = vdwg.mxu0
  %vm1965 = vcmask 7168
  %1966 = vst.msk [vmem:[%s4] sm:$0xff] %vm1965, %v1957
  %vm1967 = vcmask 1024
  %1968 = vst.msk [vmem:[%s4 + $0x8] sm:$0x3] %vm1967, %v1962
  // Predicated region
  $region18: #{duma_forward.1} parent=0 // pred_check
    _
  $region19: #{duma_forward.1} parent=0 // pred_check_branch
    %1970 = sbr.rel (0) target = $region21
  $region20: #{duma_forward.1} parent=0 // pred_region
    _
  $region21: #{duma_forward.1} parent=0 // pred_fallthru
    _
  // Predicated region
  $region22: #{duma_forward.1} parent=0 // pred_check
    _
  $region23: #{duma_forward.1} parent=0 // pred_check_branch
    %1972 = sbr.rel (0) target = $region25
  $region24: #{duma_forward.1} parent=0 // pred_region
    _
  $region25: #{duma_forward.1} parent=0 // pred_fallthru
    _

</llo_original>
